<compile_context>
chip_gen: v7x
topology: tpu7x:2x2x1
jax: 0.10.0
libtpu: 0.0.40
codegen_flags: <defaults>
</compile_context>

<pallas_src>
import functools

import jax
import jax.numpy as jnp
from jax.experimental import pallas as pl
from jax.experimental.pallas import tpu as pltpu


def _round_up(x, m):
    return (x + m - 1) // m * m


def _vmem_capacity_bytes():
    """Hardware VMEM capacity, with a conservative (v7x-sized) fallback."""
    try:
        info = pltpu.get_tpu_info()
        cap = getattr(info, "vmem_capacity_bytes", None)
        if cap:
            return int(cap)
    except Exception:
        pass
    return 64 << 20


def memory_hop_head_kernel(a_ref, h_ref, wa_ref, wh_ref, wm_ref, b1_ref, w2_ref,
                           o_ref, *, hop, hidden):
    # a_ref : [tm, Hp]        CLS embedding per (batch, choice) row (mxu dtype)
    # h_ref : [tm, HOP*Hp]    per-hop memory states, hop-major on lanes (mxu dtype)
    # wa/wh/wm : [Hp, Hp]     pre-combined row-blocks of classifier W1 (mxu dtype)
    # b1_ref : [1, Hp] f32,   w2_ref : [1, Hp] f32 (Linear(H->1) weight as a row)
    # o_ref  : [tm, 128] f32  hop-max logit broadcast over lanes (b2 added on host)
    a = a_ref[...]                                   # [tm, Hp], already MXU dtype

    # Hop-invariant part of feat @ W1 (+ b1): computed once per row tile.
    base = jnp.dot(a, wa_ref[...], preferred_element_type=jnp.float32)
    base = base + b1_ref[...]                        # [tm, Hp] f32

    w2_row = w2_ref[...]                             # [1, Hp] f32

    best = None
    for k in range(hop):                             # hop is small (3): static unroll
        h = h_ref[:, k * hidden:(k + 1) * hidden]    # [tm, Hp] tile-aligned lane slice
        ah = a * h                                   # elementwise product (stream dtype)
        z = (base
             + jnp.dot(h, wh_ref[...], preferred_element_type=jnp.float32)
             + jnp.dot(ah, wm_ref[...], preferred_element_type=jnp.float32))
        y = jnp.tanh(z)                              # f32 (EUP)
        # Linear(H -> 1) as VPU multiply + lane reduction (no N=1 MXU matmul).
        logit = jnp.sum(y * w2_row, axis=-1, keepdims=True)   # [tm, 1] f32
        best = logit if best is None else jnp.maximum(best, logit)

    # Lane-dense store: broadcast the single logit column across 128 lanes.
    o_ref[...] = jnp.broadcast_to(best, o_ref.shape).astype(o_ref.dtype)


def memory_hop_head(answers_encode, hiddens, w1, b1, w2, b2, *,
                    tile_rows=None, mxu_dtype=jnp.bfloat16):
    """answers_encode: [B, C, H]; hiddens: [B, C, HOP, H] -> output: [B, C]."""
    B, C, H = answers_encode.shape
    hop = hiddens.shape[2]
    BC = B * C

    stream_dtype = mxu_dtype                      # activations are streamed in MXU dtype
    Hp = _round_up(H, 128)                        # full-lane-width padding

    vmem_cap = _vmem_capacity_bytes()
    budget = int(vmem_cap * 0.75)                 # ~25% headroom vs physical VMEM
    big_vmem = vmem_cap >= (96 << 20)             # v5e/v6e (128 MiB) vs v7x (64 MiB)
    stream_depth = 3 if big_vmem else 2           # deeper pipelining when VMEM allows

    stream_bytes = jnp.dtype(stream_dtype).itemsize
    w_bytes = jnp.dtype(mxu_dtype).itemsize

    def vmem_need(rows):
        # Conservative: assume default double-buffering for weights and >=2 for streams.
        streams = max(stream_depth, 2) * rows * (1 + hop) * Hp * stream_bytes
        outs = 2 * rows * 128 * 4
        weights = 2 * (3 * Hp * Hp * w_bytes + 2 * Hp * 4)
        return streams + outs + weights

    # Row tiling: large tiles amortize per-grid-step overhead, but keep >= ~4 grid
    # steps when BC is small so both v7x TensorCores (and pipelining) stay busy.
    align = 16 if stream_dtype == jnp.bfloat16 else 8
    tm_target = tile_rows if tile_rows is not None else (1024 if big_vmem else 512)
    tm = min(_round_up(tm_target, align), _round_up(pl.cdiv(BC, 4), align))
    tm = max(tm, align)
    while vmem_need(tm) > budget and tm > align:
        tm = max(align, _round_up(tm // 2, align))

    n_tiles = pl.cdiv(BC, tm)
    BC_pad = n_tiles * tm
    vmem_limit = int(min(budget, max(2 * vmem_need(tm), 16 << 20)))

    # ---- host-side layout prep (padding + dtype of the streamed activations) ----
    a = answers_encode.reshape(BC, H)
    h4 = hiddens
    if Hp > H:
        a = jnp.pad(a, ((0, 0), (0, Hp - H)))
        h4 = jnp.pad(h4, ((0, 0), (0, 0), (0, 0), (0, Hp - H)))
    # Free reshape: hop stays on the trailing (lane) axis; no HBM transpose needed.
    h = h4.reshape(BC, hop * Hp)
    a = a.astype(stream_dtype)
    h = h.astype(stream_dtype)
    if BC_pad > BC:
        a = jnp.pad(a, ((0, BC_pad - BC), (0, 0)))
        h = jnp.pad(h, ((0, BC_pad - BC), (0, 0)))

    # Fold the concat algebraically:
    #   cat(a, h, a-h, a*h) @ W1 == a@(W1a+W1c) + h@(W1b-W1c) + (a*h)@W1d
    w1f = w1.astype(jnp.float32)
    w1a, w1b, w1c, w1d = w1f[0:H], w1f[H:2 * H], w1f[2 * H:3 * H], w1f[3 * H:4 * H]

    def pad_w(wblk):
        if Hp > H:
            wblk = jnp.pad(wblk, ((0, Hp - H), (0, Hp - H)))
        return wblk.astype(mxu_dtype)

    wa = pad_w(w1a + w1c)
    wh = pad_w(w1b - w1c)
    wm = pad_w(w1d)
    b1_row = jnp.pad(b1.reshape(1, H).astype(jnp.float32), ((0, 0), (0, Hp - H)))
    w2_row = jnp.pad(w2.reshape(1, H).astype(jnp.float32), ((0, 0), (0, Hp - H)))

    kernel = functools.partial(memory_hop_head_kernel, hop=hop, hidden=Hp)

    def run(use_buffered):
        def spec(shape, imap, depth):
            if use_buffered:
                return pl.BlockSpec(shape, imap, pipeline_mode=pl.Buffered(depth))
            return pl.BlockSpec(shape, imap)

        in_specs = [
            spec((tm, Hp), lambda i: (i, 0), stream_depth),        # a: streamed rows
            spec((tm, hop * Hp), lambda i: (i, 0), stream_depth),  # h: streamed rows
            spec((Hp, Hp), lambda i: (0, 0), 1),                   # Wa: resident
            spec((Hp, Hp), lambda i: (0, 0), 1),                   # Wh: resident
            spec((Hp, Hp), lambda i: (0, 0), 1),                   # Wm: resident
            spec((1, Hp), lambda i: (0, 0), 1),                    # b1 row: resident
            spec((1, Hp), lambda i: (0, 0), 1),                    # w2 row: resident
        ]
        return pl.pallas_call(
            kernel,
            out_shape=jax.ShapeDtypeStruct((BC_pad, 128), jnp.float32),
            grid=(n_tiles,),
            in_specs=in_specs,
            out_specs=pl.BlockSpec((tm, 128), lambda i: (i, 0)),
            compiler_params=pltpu.CompilerParams(
                dimension_semantics=("parallel",),
                vmem_limit_bytes=vmem_limit),
        )(a, h, wa, wh, wm, b1_row, w2_row)

    if hasattr(pl, "Buffered"):
        try:
            out = run(True)
        except Exception:
            # This JAX build rejected pipeline_mode / Buffered(1); fall back to
            # the default double-buffered pipeline (identical semantics).
            out = run(False)
    else:
        out = run(False)

    # b2 is hop-invariant: max_k(x_k) + b2 == max_k(x_k + b2) -> add after the max.
    return out[:BC, 0].reshape(B, C) + b2[0]


def reference_head(answers_encode, hiddens, w1, b1, w2, b2):
    """Plain-JAX mirror of the PyTorch head for the correctness check."""
    hop = hiddens.shape[2]
    a_rep = jnp.repeat(answers_encode[:, :, None, :], hop, axis=2)           # [B,C,HOP,H]
    feat = jnp.concatenate([a_rep, hiddens, a_rep - hiddens, a_rep * hiddens], axis=-1)
    y = jnp.tanh(feat @ w1 + b1)
    logits = (y @ w2 + b2)[..., 0]                                           # [B,C,HOP]
    return jnp.max(logits, axis=2)                                           # [B,C]


if __name__ == "__main__":
    # Small shapes consistent with the module's forward:
    B, C, HOP, H = 2, 3, 3, 32        # batch, num choices, hop_num, hidden_dim

    key = jax.random.PRNGKey(0)
    k_a, k_h, k_w1, k_b1, k_w2, k_b2 = jax.random.split(key, 6)

    # Synthetic deterministic stand-ins for the encoder / multihop outputs.
    answers_encode = jax.random.normal(k_a, (B, C, H), dtype=jnp.float32)
    hiddens = jax.random.normal(k_h, (B, C, HOP, H), dtype=jnp.float32)

    # Deterministic classifier parameters (Linear(4H->H), Linear(H->1)),
    # stored in (in_features, out_features) layout so the math is x @ W.
    lim1 = 1.0 / jnp.sqrt(4.0 * H)
    lim2 = 1.0 / jnp.sqrt(1.0 * H)
    w1 = jax.random.uniform(k_w1, (4 * H, H), minval=-lim1, maxval=lim1, dtype=jnp.float32)
    b1 = jax.random.uniform(k_b1, (H,), minval=-lim1, maxval=lim1, dtype=jnp.float32)
    w2 = jax.random.uniform(k_w2, (H, 1), minval=-lim2, maxval=lim2, dtype=jnp.float32)
    b2 = jax.random.uniform(k_b2, (1,), minval=-lim2, maxval=lim2, dtype=jnp.float32)

    ref = reference_head(answers_encode, hiddens, w1, b1, w2, b2)

    # Default bf16-MXU / bf16-stream path (preferred on all generations).
    out_bf16 = memory_hop_head(answers_encode, hiddens, w1, b1, w2, b2)
    out_bf16 = jax.block_until_ready(out_bf16)
    assert out_bf16.shape == (B, C), out_bf16.shape
    assert jnp.allclose(out_bf16, ref, atol=5e-2, rtol=5e-2), (out_bf16, ref)

    # f32-MXU path kept for consumers that compare near-equal logits.
    out_f32 = memory_hop_head(answers_encode, hiddens, w1, b1, w2, b2,
                              mxu_dtype=jnp.float32)
    out_f32 = jax.block_until_ready(out_f32)
    assert jnp.allclose(out_f32, ref, atol=2e-5, rtol=2e-5), (out_f32, ref)

    print("KERNEL_OK")
</pallas_src>

<mosaic_0001>
module attributes {stable_mosaic.version = 11 : i64} {
  func.func @memory_hop_head_kernel(%arg0: i32, %arg1: memref<16x128xbf16, #tpu.memory_space<vmem>>, %arg2: memref<16x384xbf16, #tpu.memory_space<vmem>>, %arg3: memref<128x128xbf16, #tpu.memory_space<vmem>>, %arg4: memref<128x128xbf16, #tpu.memory_space<vmem>>, %arg5: memref<128x128xbf16, #tpu.memory_space<vmem>>, %arg6: memref<1x128xf32, #tpu.memory_space<vmem>>, %arg7: memref<1x128xf32, #tpu.memory_space<vmem>>, %arg8: memref<16x128xf32, #tpu.memory_space<vmem>>) attributes {dimension_semantics = [#tpu.dimension_semantics<parallel>], iteration_bounds = array<i64: 1>, scalar_prefetch = 0 : i64, scratch_operands = 0 : i64, tpu.core_type = #tpu.core_type<tc>, window_params = [{pipeline_mode = #tpu.pipeline_mode<double_buffered>, transform_indices = @transform_0, window_bounds = array<i64: 16, 128>}, {pipeline_mode = #tpu.pipeline_mode<double_buffered>, transform_indices = @transform_1, window_bounds = array<i64: 16, 384>}, {pipeline_mode = #tpu.pipeline_mode<synchronous>, transform_indices = @transform_2, window_bounds = array<i64: 128, 128>}, {pipeline_mode = #tpu.pipeline_mode<synchronous>, transform_indices = @transform_3, window_bounds = array<i64: 128, 128>}, {pipeline_mode = #tpu.pipeline_mode<synchronous>, transform_indices = @transform_4, window_bounds = array<i64: 128, 128>}, {pipeline_mode = #tpu.pipeline_mode<synchronous>, transform_indices = @transform_5, window_bounds = array<i64: 1, 128>}, {pipeline_mode = #tpu.pipeline_mode<synchronous>, transform_indices = @transform_6, window_bounds = array<i64: 1, 128>}, {transform_indices = @transform_7, window_bounds = array<i64: 16, 128>}]} {
    %c0 = arith.constant 0 : index
    %c0_0 = arith.constant 0 : index
    %0 = vector.load %arg1[%c0, %c0_0] : memref<16x128xbf16, #tpu.memory_space<vmem>>, vector<16x128xbf16>
    %c0_1 = arith.constant 0 : index
    %c0_2 = arith.constant 0 : index
    %1 = vector.load %arg3[%c0_1, %c0_2] : memref<128x128xbf16, #tpu.memory_space<vmem>>, vector<128x128xbf16>
    %cst = arith.constant dense<0.000000e+00> : vector<16x128xf32>
    %2 = tpu.matmul %0, %1, %cst {dimension_numbers = #tpu.dot_dimension_numbers<[1], [0], [0], [1], [0, 0, 1, 1], [], []>} : vector<16x128xbf16>, vector<128x128xbf16>, vector<16x128xf32> -> vector<16x128xf32>
    %c0_3 = arith.constant 0 : index
    %c0_4 = arith.constant 0 : index
    %3 = vector.load %arg6[%c0_3, %c0_4] : memref<1x128xf32, #tpu.memory_space<vmem>>, vector<1x128xf32>
    %4 = vector.broadcast %3 : vector<1x128xf32> to vector<16x128xf32>
    %5 = arith.addf %2, %4 : vector<16x128xf32>
    %c0_5 = arith.constant 0 : index
    %c0_6 = arith.constant 0 : index
    %6 = vector.load %arg7[%c0_5, %c0_6] : memref<1x128xf32, #tpu.memory_space<vmem>>, vector<1x128xf32>
    %c0_7 = arith.constant 0 : index
    %c0_8 = arith.constant 0 : index
    %7 = vector.load %arg2[%c0_7, %c0_8] : memref<16x384xbf16, #tpu.memory_space<vmem>>, vector<16x128xbf16>
    %8 = arith.mulf %0, %7 : vector<16x128xbf16>
    %c0_9 = arith.constant 0 : index
    %c0_10 = arith.constant 0 : index
    %9 = vector.load %arg4[%c0_9, %c0_10] : memref<128x128xbf16, #tpu.memory_space<vmem>>, vector<128x128xbf16>
    %cst_11 = arith.constant dense<0.000000e+00> : vector<16x128xf32>
    %10 = tpu.matmul %7, %9, %cst_11 {dimension_numbers = #tpu.dot_dimension_numbers<[1], [0], [0], [1], [0, 0, 1, 1], [], []>} : vector<16x128xbf16>, vector<128x128xbf16>, vector<16x128xf32> -> vector<16x128xf32>
    %11 = arith.addf %5, %10 : vector<16x128xf32>
    %c0_12 = arith.constant 0 : index
    %c0_13 = arith.constant 0 : index
    %12 = vector.load %arg5[%c0_12, %c0_13] : memref<128x128xbf16, #tpu.memory_space<vmem>>, vector<128x128xbf16>
    %cst_14 = arith.constant dense<0.000000e+00> : vector<16x128xf32>
    %13 = tpu.matmul %8, %12, %cst_14 {dimension_numbers = #tpu.dot_dimension_numbers<[1], [0], [0], [1], [0, 0, 1, 1], [], []>} : vector<16x128xbf16>, vector<128x128xbf16>, vector<16x128xf32> -> vector<16x128xf32>
    %14 = arith.addf %11, %13 : vector<16x128xf32>
    %15 = math.tanh %14 : vector<16x128xf32>
    %16 = vector.broadcast %6 : vector<1x128xf32> to vector<16x128xf32>
    %17 = arith.mulf %15, %16 : vector<16x128xf32>
    %cst_15 = arith.constant dense<0.000000e+00> : vector<16xf32>
    %18 = vector.multi_reduction <add>, %17, %cst_15 [1] : vector<16x128xf32> to vector<16xf32>
    %19 = vector.shape_cast %18 : vector<16xf32> to vector<16x1xf32>
    %c0_16 = arith.constant 0 : index
    %c128 = arith.constant 128 : index
    %20 = vector.load %arg2[%c0_16, %c128] : memref<16x384xbf16, #tpu.memory_space<vmem>>, vector<16x128xbf16>
    %21 = arith.mulf %0, %20 : vector<16x128xbf16>
    %c0_17 = arith.constant 0 : index
    %c0_18 = arith.constant 0 : index
    %22 = vector.load %arg4[%c0_17, %c0_18] : memref<128x128xbf16, #tpu.memory_space<vmem>>, vector<128x128xbf16>
    %cst_19 = arith.constant dense<0.000000e+00> : vector<16x128xf32>
    %23 = tpu.matmul %20, %22, %cst_19 {dimension_numbers = #tpu.dot_dimension_numbers<[1], [0], [0], [1], [0, 0, 1, 1], [], []>} : vector<16x128xbf16>, vector<128x128xbf16>, vector<16x128xf32> -> vector<16x128xf32>
    %24 = arith.addf %5, %23 : vector<16x128xf32>
    %c0_20 = arith.constant 0 : index
    %c0_21 = arith.constant 0 : index
    %25 = vector.load %arg5[%c0_20, %c0_21] : memref<128x128xbf16, #tpu.memory_space<vmem>>, vector<128x128xbf16>
    %cst_22 = arith.constant dense<0.000000e+00> : vector<16x128xf32>
    %26 = tpu.matmul %21, %25, %cst_22 {dimension_numbers = #tpu.dot_dimension_numbers<[1], [0], [0], [1], [0, 0, 1, 1], [], []>} : vector<16x128xbf16>, vector<128x128xbf16>, vector<16x128xf32> -> vector<16x128xf32>
    %27 = arith.addf %24, %26 : vector<16x128xf32>
    %28 = math.tanh %27 : vector<16x128xf32>
    %29 = vector.broadcast %6 : vector<1x128xf32> to vector<16x128xf32>
    %30 = arith.mulf %28, %29 : vector<16x128xf32>
    %cst_23 = arith.constant dense<0.000000e+00> : vector<16xf32>
    %31 = vector.multi_reduction <add>, %30, %cst_23 [1] : vector<16x128xf32> to vector<16xf32>
    %32 = vector.shape_cast %31 : vector<16xf32> to vector<16x1xf32>
    %33 = arith.maximumf %19, %32 : vector<16x1xf32>
    %c0_24 = arith.constant 0 : index
    %c256 = arith.constant 256 : index
    %34 = vector.load %arg2[%c0_24, %c256] : memref<16x384xbf16, #tpu.memory_space<vmem>>, vector<16x128xbf16>
    %35 = arith.mulf %0, %34 : vector<16x128xbf16>
    %c0_25 = arith.constant 0 : index
    %c0_26 = arith.constant 0 : index
    %36 = vector.load %arg4[%c0_25, %c0_26] : memref<128x128xbf16, #tpu.memory_space<vmem>>, vector<128x128xbf16>
    %cst_27 = arith.constant dense<0.000000e+00> : vector<16x128xf32>
    %37 = tpu.matmul %34, %36, %cst_27 {dimension_numbers = #tpu.dot_dimension_numbers<[1], [0], [0], [1], [0, 0, 1, 1], [], []>} : vector<16x128xbf16>, vector<128x128xbf16>, vector<16x128xf32> -> vector<16x128xf32>
    %38 = arith.addf %5, %37 : vector<16x128xf32>
    %c0_28 = arith.constant 0 : index
    %c0_29 = arith.constant 0 : index
    %39 = vector.load %arg5[%c0_28, %c0_29] : memref<128x128xbf16, #tpu.memory_space<vmem>>, vector<128x128xbf16>
    %cst_30 = arith.constant dense<0.000000e+00> : vector<16x128xf32>
    %40 = tpu.matmul %35, %39, %cst_30 {dimension_numbers = #tpu.dot_dimension_numbers<[1], [0], [0], [1], [0, 0, 1, 1], [], []>} : vector<16x128xbf16>, vector<128x128xbf16>, vector<16x128xf32> -> vector<16x128xf32>
    %41 = arith.addf %38, %40 : vector<16x128xf32>
    %42 = math.tanh %41 : vector<16x128xf32>
    %43 = vector.broadcast %6 : vector<1x128xf32> to vector<16x128xf32>
    %44 = arith.mulf %42, %43 : vector<16x128xf32>
    %cst_31 = arith.constant dense<0.000000e+00> : vector<16xf32>
    %45 = vector.multi_reduction <add>, %44, %cst_31 [1] : vector<16x128xf32> to vector<16xf32>
    %46 = vector.shape_cast %45 : vector<16xf32> to vector<16x1xf32>
    %47 = arith.maximumf %33, %46 : vector<16x1xf32>
    %48 = vector.shape_cast %47 : vector<16x1xf32> to vector<16x1xf32>
    %49 = vector.broadcast %48 : vector<16x1xf32> to vector<16x128xf32>
    %c0_32 = arith.constant 0 : index
    %c0_33 = arith.constant 0 : index
    %50 = vector.load %arg8[%c0_32, %c0_33] : memref<16x128xf32, #tpu.memory_space<vmem>>, vector<16x128xf32>
    tpu.vector_store %arg8[%c0_32, %c0_33], %49 {strides = array<i32>} : memref<16x128xf32, #tpu.memory_space<vmem>>, vector<16x128xf32>,
    return
  }
  func.func @transform_0(%arg0: i32) -> (i32, i32) {
    %c0_i32 = arith.constant 0 : i32
    %c0_i32_0 = arith.constant 0 : i32
    return %arg0, %c0_i32 : i32, i32
  }
  func.func @transform_1(%arg0: i32) -> (i32, i32) {
    %c0_i32 = arith.constant 0 : i32
    %c0_i32_0 = arith.constant 0 : i32
    return %arg0, %c0_i32 : i32, i32
  }
  func.func @transform_2(%arg0: i32) -> (i32, i32) {
    %c0_i32 = arith.constant 0 : i32
    %c0_i32_0 = arith.constant 0 : i32
    %c0_i32_1 = arith.constant 0 : i32
    return %c0_i32, %c0_i32_0 : i32, i32
  }
  func.func @transform_3(%arg0: i32) -> (i32, i32) {
    %c0_i32 = arith.constant 0 : i32
    %c0_i32_0 = arith.constant 0 : i32
    %c0_i32_1 = arith.constant 0 : i32
    return %c0_i32, %c0_i32_0 : i32, i32
  }
  func.func @transform_4(%arg0: i32) -> (i32, i32) {
    %c0_i32 = arith.constant 0 : i32
    %c0_i32_0 = arith.constant 0 : i32
    %c0_i32_1 = arith.constant 0 : i32
    return %c0_i32, %c0_i32_0 : i32, i32
  }
  func.func @transform_5(%arg0: i32) -> (i32, i32) {
    %c0_i32 = arith.constant 0 : i32
    %c0_i32_0 = arith.constant 0 : i32
    %c0_i32_1 = arith.constant 0 : i32
    return %c0_i32, %c0_i32_0 : i32, i32
  }
  func.func @transform_6(%arg0: i32) -> (i32, i32) {
    %c0_i32 = arith.constant 0 : i32
    %c0_i32_0 = arith.constant 0 : i32
    %c0_i32_1 = arith.constant 0 : i32
    return %c0_i32, %c0_i32_0 : i32, i32
  }
  func.func @transform_7(%arg0: i32) -> (i32, i32) {
    %c0_i32 = arith.constant 0 : i32
    %c0_i32_0 = arith.constant 0 : i32
    return %arg0, %c0_i32 : i32, i32
  }
}

module attributes {stable_mosaic.version = 11 : i64} {
  func.func @memory_hop_head_kernel(%arg0: i32, %arg1: memref<16x128xbf16, #tpu.memory_space<vmem>>, %arg2: memref<16x384xbf16, #tpu.memory_space<vmem>>, %arg3: memref<128x128xbf16, #tpu.memory_space<vmem>>, %arg4: memref<128x128xbf16, #tpu.memory_space<vmem>>, %arg5: memref<128x128xbf16, #tpu.memory_space<vmem>>, %arg6: memref<1x128xf32, #tpu.memory_space<vmem>>, %arg7: memref<1x128xf32, #tpu.memory_space<vmem>>, %arg8: memref<16x128xf32, #tpu.memory_space<vmem>>) attributes {dimension_semantics = [#tpu.dimension_semantics<parallel>], iteration_bounds = array<i64: 1>, scalar_prefetch = 0 : i64, scratch_operands = 0 : i64, tpu.core_type = #tpu.core_type<tc>, window_params = [{transform_indices = @transform_0, window_bounds = array<i64: 16, 128>}, {transform_indices = @transform_1, window_bounds = array<i64: 16, 384>}, {pipeline_mode = #tpu.pipeline_mode<synchronous>, transform_indices = @transform_2, window_bounds = array<i64: 128, 128>}, {pipeline_mode = #tpu.pipeline_mode<synchronous>, transform_indices = @transform_3, window_bounds = array<i64: 128, 128>}, {pipeline_mode = #tpu.pipeline_mode<synchronous>, transform_indices = @transform_4, window_bounds = array<i64: 128, 128>}, {pipeline_mode = #tpu.pipeline_mode<synchronous>, transform_indices = @transform_5, window_bounds = array<i64: 1, 128>}, {pipeline_mode = #tpu.pipeline_mode<synchronous>, transform_indices = @transform_6, window_bounds = array<i64: 1, 128>}, {transform_indices = @transform_7, window_bounds = array<i64: 16, 128>}]} {
    %c0 = arith.constant 0 : index
    %c0_0 = arith.constant 0 : index
    %0 = vector.load %arg1[%c0, %c0_0] : memref<16x128xbf16, #tpu.memory_space<vmem>>, vector<16x128xbf16>
    %c0_1 = arith.constant 0 : index
    %c0_2 = arith.constant 0 : index
    %1 = vector.load %arg3[%c0_1, %c0_2] : memref<128x128xbf16, #tpu.memory_space<vmem>>, vector<128x128xbf16>
    %cst = arith.constant dense<0.000000e+00> : vector<16x128xf32>
    %2 = tpu.matmul %0, %1, %cst {dimension_numbers = #tpu.dot_dimension_numbers<[1], [0], [0], [1], [0, 0, 1, 1], [], []>} : vector<16x128xbf16>, vector<128x128xbf16>, vector<16x128xf32> -> vector<16x128xf32>
    %c0_3 = arith.constant 0 : index
    %c0_4 = arith.constant 0 : index
    %3 = vector.load %arg6[%c0_3, %c0_4] : memref<1x128xf32, #tpu.memory_space<vmem>>, vector<1x128xf32>
    %4 = vector.broadcast %3 : vector<1x128xf32> to vector<16x128xf32>
    %5 = arith.addf %2, %4 : vector<16x128xf32>
    %c0_5 = arith.constant 0 : index
    %c0_6 = arith.constant 0 : index
    %6 = vector.load %arg7[%c0_5, %c0_6] : memref<1x128xf32, #tpu.memory_space<vmem>>, vector<1x128xf32>
    %c0_7 = arith.constant 0 : index
    %c0_8 = arith.constant 0 : index
    %7 = vector.load %arg2[%c0_7, %c0_8] : memref<16x384xbf16, #tpu.memory_space<vmem>>, vector<16x128xbf16>
    %8 = arith.mulf %0, %7 : vector<16x128xbf16>
    %c0_9 = arith.constant 0 : index
    %c0_10 = arith.constant 0 : index
    %9 = vector.load %arg4[%c0_9, %c0_10] : memref<128x128xbf16, #tpu.memory_space<vmem>>, vector<128x128xbf16>
    %cst_11 = arith.constant dense<0.000000e+00> : vector<16x128xf32>
    %10 = tpu.matmul %7, %9, %cst_11 {dimension_numbers = #tpu.dot_dimension_numbers<[1], [0], [0], [1], [0, 0, 1, 1], [], []>} : vector<16x128xbf16>, vector<128x128xbf16>, vector<16x128xf32> -> vector<16x128xf32>
    %11 = arith.addf %5, %10 : vector<16x128xf32>
    %c0_12 = arith.constant 0 : index
    %c0_13 = arith.constant 0 : index
    %12 = vector.load %arg5[%c0_12, %c0_13] : memref<128x128xbf16, #tpu.memory_space<vmem>>, vector<128x128xbf16>
    %cst_14 = arith.constant dense<0.000000e+00> : vector<16x128xf32>
    %13 = tpu.matmul %8, %12, %cst_14 {dimension_numbers = #tpu.dot_dimension_numbers<[1], [0], [0], [1], [0, 0, 1, 1], [], []>} : vector<16x128xbf16>, vector<128x128xbf16>, vector<16x128xf32> -> vector<16x128xf32>
    %14 = arith.addf %11, %13 : vector<16x128xf32>
    %15 = math.tanh %14 : vector<16x128xf32>
    %16 = vector.broadcast %6 : vector<1x128xf32> to vector<16x128xf32>
    %17 = arith.mulf %15, %16 : vector<16x128xf32>
    %cst_15 = arith.constant dense<0.000000e+00> : vector<16xf32>
    %18 = vector.multi_reduction <add>, %17, %cst_15 [1] : vector<16x128xf32> to vector<16xf32>
    %19 = vector.shape_cast %18 : vector<16xf32> to vector<16x1xf32>
    %c0_16 = arith.constant 0 : index
    %c128 = arith.constant 128 : index
    %20 = vector.load %arg2[%c0_16, %c128] : memref<16x384xbf16, #tpu.memory_space<vmem>>, vector<16x128xbf16>
    %21 = arith.mulf %0, %20 : vector<16x128xbf16>
    %c0_17 = arith.constant 0 : index
    %c0_18 = arith.constant 0 : index
    %22 = vector.load %arg4[%c0_17, %c0_18] : memref<128x128xbf16, #tpu.memory_space<vmem>>, vector<128x128xbf16>
    %cst_19 = arith.constant dense<0.000000e+00> : vector<16x128xf32>
    %23 = tpu.matmul %20, %22, %cst_19 {dimension_numbers = #tpu.dot_dimension_numbers<[1], [0], [0], [1], [0, 0, 1, 1], [], []>} : vector<16x128xbf16>, vector<128x128xbf16>, vector<16x128xf32> -> vector<16x128xf32>
    %24 = arith.addf %5, %23 : vector<16x128xf32>
    %c0_20 = arith.constant 0 : index
    %c0_21 = arith.constant 0 : index
    %25 = vector.load %arg5[%c0_20, %c0_21] : memref<128x128xbf16, #tpu.memory_space<vmem>>, vector<128x128xbf16>
    %cst_22 = arith.constant dense<0.000000e+00> : vector<16x128xf32>
    %26 = tpu.matmul %21, %25, %cst_22 {dimension_numbers = #tpu.dot_dimension_numbers<[1], [0], [0], [1], [0, 0, 1, 1], [], []>} : vector<16x128xbf16>, vector<128x128xbf16>, vector<16x128xf32> -> vector<16x128xf32>
    %27 = arith.addf %24, %26 : vector<16x128xf32>
    %28 = math.tanh %27 : vector<16x128xf32>
    %29 = vector.broadcast %6 : vector<1x128xf32> to vector<16x128xf32>
    %30 = arith.mulf %28, %29 : vector<16x128xf32>
    %cst_23 = arith.constant dense<0.000000e+00> : vector<16xf32>
    %31 = vector.multi_reduction <add>, %30, %cst_23 [1] : vector<16x128xf32> to vector<16xf32>
    %32 = vector.shape_cast %31 : vector<16xf32> to vector<16x1xf32>
    %33 = arith.maximumf %19, %32 : vector<16x1xf32>
    %c0_24 = arith.constant 0 : index
    %c256 = arith.constant 256 : index
    %34 = vector.load %arg2[%c0_24, %c256] : memref<16x384xbf16, #tpu.memory_space<vmem>>, vector<16x128xbf16>
    %35 = arith.mulf %0, %34 : vector<16x128xbf16>
    %c0_25 = arith.constant 0 : index
    %c0_26 = arith.constant 0 : index
    %36 = vector.load %arg4[%c0_25, %c0_26] : memref<128x128xbf16, #tpu.memory_space<vmem>>, vector<128x128xbf16>
    %cst_27 = arith.constant dense<0.000000e+00> : vector<16x128xf32>
    %37 = tpu.matmul %34, %36, %cst_27 {dimension_numbers = #tpu.dot_dimension_numbers<[1], [0], [0], [1], [0, 0, 1, 1], [], []>} : vector<16x128xbf16>, vector<128x128xbf16>, vector<16x128xf32> -> vector<16x128xf32>
    %38 = arith.addf %5, %37 : vector<16x128xf32>
    %c0_28 = arith.constant 0 : index
    %c0_29 = arith.constant 0 : index
    %39 = vector.load %arg5[%c0_28, %c0_29] : memref<128x128xbf16, #tpu.memory_space<vmem>>, vector<128x128xbf16>
    %cst_30 = arith.constant dense<0.000000e+00> : vector<16x128xf32>
    %40 = tpu.matmul %35, %39, %cst_30 {dimension_numbers = #tpu.dot_dimension_numbers<[1], [0], [0], [1], [0, 0, 1, 1], [], []>} : vector<16x128xbf16>, vector<128x128xbf16>, vector<16x128xf32> -> vector<16x128xf32>
    %41 = arith.addf %38, %40 : vector<16x128xf32>
    %42 = math.tanh %41 : vector<16x128xf32>
    %43 = vector.broadcast %6 : vector<1x128xf32> to vector<16x128xf32>
    %44 = arith.mulf %42, %43 : vector<16x128xf32>
    %cst_31 = arith.constant dense<0.000000e+00> : vector<16xf32>
    %45 = vector.multi_reduction <add>, %44, %cst_31 [1] : vector<16x128xf32> to vector<16xf32>
    %46 = vector.shape_cast %45 : vector<16xf32> to vector<16x1xf32>
    %47 = arith.maximumf %33, %46 : vector<16x1xf32>
    %48 = vector.shape_cast %47 : vector<16x1xf32> to vector<16x1xf32>
    %49 = vector.broadcast %48 : vector<16x1xf32> to vector<16x128xf32>
    %c0_32 = arith.constant 0 : index
    %c0_33 = arith.constant 0 : index
    %50 = vector.load %arg8[%c0_32, %c0_33] : memref<16x128xf32, #tpu.memory_space<vmem>>, vector<16x128xf32>
    tpu.vector_store %arg8[%c0_32, %c0_33], %49 {strides = array<i32>} : memref<16x128xf32, #tpu.memory_space<vmem>>, vector<16x128xf32>,
    return
  }
  func.func @transform_0(%arg0: i32) -> (i32, i32) {
    %c0_i32 = arith.constant 0 : i32
    %c0_i32_0 = arith.constant 0 : i32
    return %arg0, %c0_i32 : i32, i32
  }
  func.func @transform_1(%arg0: i32) -> (i32, i32) {
    %c0_i32 = arith.constant 0 : i32
    %c0_i32_0 = arith.constant 0 : i32
    return %arg0, %c0_i32 : i32, i32
  }
  func.func @transform_2(%arg0: i32) -> (i32, i32) {
    %c0_i32 = arith.constant 0 : i32
    %c0_i32_0 = arith.constant 0 : i32
    %c0_i32_1 = arith.constant 0 : i32
    return %c0_i32, %c0_i32_0 : i32, i32
  }
  func.func @transform_3(%arg0: i32) -> (i32, i32) {
    %c0_i32 = arith.constant 0 : i32
    %c0_i32_0 = arith.constant 0 : i32
    %c0_i32_1 = arith.constant 0 : i32
    return %c0_i32, %c0_i32_0 : i32, i32
  }
  func.func @transform_4(%arg0: i32) -> (i32, i32) {
    %c0_i32 = arith.constant 0 : i32
    %c0_i32_0 = arith.constant 0 : i32
    %c0_i32_1 = arith.constant 0 : i32
    return %c0_i32, %c0_i32_0 : i32, i32
  }
  func.func @transform_5(%arg0: i32) -> (i32, i32) {
    %c0_i32 = arith.constant 0 : i32
    %c0_i32_0 = arith.constant 0 : i32
    %c0_i32_1 = arith.constant 0 : i32
    return %c0_i32, %c0_i32_0 : i32, i32
  }
  func.func @transform_6(%arg0: i32) -> (i32, i32) {
    %c0_i32 = arith.constant 0 : i32
    %c0_i32_0 = arith.constant 0 : i32
    %c0_i32_1 = arith.constant 0 : i32
    return %c0_i32, %c0_i32_0 : i32, i32
  }
  func.func @transform_7(%arg0: i32) -> (i32, i32) {
    %c0_i32 = arith.constant 0 : i32
    %c0_i32_0 = arith.constant 0 : i32
    return %arg0, %c0_i32 : i32, i32
  }
}

</mosaic_0001>

<llo_original>
// kernel: tpu_custom_call.1
$region0: #{tpu_custom_call.1}
  #allocation0 [shape = 'u32[]', space=smem, size = 0x4, offset = 0x4, fixed_abs, tag = 'smem constant byte address 0x4 - core index']
  #allocation1 [shape = 'u32[144,128]{1,0:T(1,128)}', space=vmem, size = 0x12000, scoped, tag = 'internal scratch']
  %s0 = inlined_call_operand.hbm [shape: bf16[16,128], index: 0, kind: input, shape index: {}]
  %s1 = inlined_call_operand.hbm [shape: bf16[16,384], index: 1, kind: input, shape index: {}]
  %s2 = inlined_call_operand.hbm [shape: bf16[128,128], index: 2, kind: input, shape index: {}]
  %s3 = inlined_call_operand.hbm [shape: bf16[128,128], index: 3, kind: input, shape index: {}]
  %s4 = inlined_call_operand.hbm [shape: bf16[128,128], index: 4, kind: input, shape index: {}]
  %s5 = inlined_call_operand.vmem [shape: f32[1,128], index: 5, kind: input, shape index: {}]
  %s6 = inlined_call_operand.vmem [shape: f32[1,128], index: 6, kind: input, shape index: {}]
  %s7 = inlined_call_operand.hbm [shape: f32[16,128], index: 7, kind: output, shape index: {}]
  %s8 = sld [smem:[#allocation0]]
  $region58: #{tpu_custom_call.1} parent=0
    _
  %s10 = ssub.s32 1, %s8
  %s11 = scalar_select 0, %s10, %s8
  $region1: #{tpu_custom_call.1} parent=0
    #allocation2 [shape = 'u8[4096]{0}', space=vmem, size = 0x1000, scoped, tag = 'input window, operand 0, single buffered']
    #allocation3 [shape = 's32[1]{0}', space=sflag, size = 0x4, scoped, tag = 'scoped memory for tpu_custom_call.1']
    #allocation4 [shape = 's32[1]{0}', space=sflag, size = 0x4, scoped, tag = 'scoped memory for tpu_custom_call.1']
    #allocation5 [shape = 'u8[12288]{0}', space=vmem, size = 0x3000, scoped, tag = 'input window, operand 1, single buffered']
    #allocation6 [shape = 's32[1]{0}', space=sflag, size = 0x4, scoped, tag = 'scoped memory for tpu_custom_call.1']
    #allocation7 [shape = 'u8[32768]{0}', space=vmem, size = 0x8000, scoped, tag = 'input window, operand 2, single buffered']
    #allocation8 [shape = 'u8[32768]{0}', space=vmem, size = 0x8000, scoped, tag = 'input window, operand 3, single buffered']
    #allocation9 [shape = 's32[1]{0}', space=sflag, size = 0x4, scoped, tag = 'scoped memory for tpu_custom_call.1']
    #allocation10 [shape = 'u8[32768]{0}', space=vmem, size = 0x8000, scoped, tag = 'input window, operand 4, single buffered']
    #allocation11 [shape = 'u8[8192]{0}', space=vmem, size = 0x2000, scoped, tag = 'output window, operand 0, single buffered']
    %12 = vsyncpa [#allocation3], 0
    %13 = vsyncpa [#allocation6], 0
    %14 = vsyncpa [#allocation9], 0
    %15 = vsyncpa [#allocation4], 0
    // Predicated region
    $region2: #{tpu_custom_call.1} parent=1 // pred_check
      _
    $region3: #{tpu_custom_call.1} parent=1 // pred_check_branch
      %17 = sbr.rel (0) target = $region5
    $region4: #{tpu_custom_call.1} parent=1 // pred_region
      %s19 = ssub.s32 128, 128
      %20 = vsyncadd [#allocation3], %s19
      %s21 = sshll.u32 [#allocation2], 4
      %s22 = int_to_ptr.vmem [resolvable:$true] %s21
      %27 = dma.hbm_to_vmem [thread:$0]  %s0, 128, %s22, [#allocation3], 64, 64, 4
    $region5: #{tpu_custom_call.1} parent=1 // pred_fallthru
      _
    // Predicated region
    $region6: #{tpu_custom_call.1} parent=1 // pred_check
      _
    $region7: #{tpu_custom_call.1} parent=1 // pred_check_branch
      %29 = sbr.rel (0) target = $region9
    $region8: #{tpu_custom_call.1} parent=1 // pred_region
      %s31 = ssub.s32 384, 384
      %32 = vsyncadd [#allocation6], %s31
      %s33 = sshll.u32 [#allocation5], 4
      %s34 = int_to_ptr.vmem [resolvable:$true] %s33
      %39 = dma.hbm_to_vmem [thread:$0]  %s1, 384, %s34, [#allocation6], 192, 192, 12
    $region9: #{tpu_custom_call.1} parent=1 // pred_fallthru
      _
    // Predicated region
    $region10: #{tpu_custom_call.1} parent=1 // pred_check
      _
    $region11: #{tpu_custom_call.1} parent=1 // pred_check_branch
      %41 = sbr.rel (0) target = $region13
    $region12: #{tpu_custom_call.1} parent=1 // pred_region
      %s43 = ssub.s32 1024, 1024
      %44 = vsyncadd [#allocation6], %s43
      %s45 = sshll.u32 [#allocation7], 4
      %s46 = int_to_ptr.vmem [resolvable:$true] %s45
      %51 = dma.hbm_to_vmem [thread:$0]  %s2, 1024, %s46, [#allocation6], 64, 64, 4
    $region13: #{tpu_custom_call.1} parent=1 // pred_fallthru
      _
    // Predicated region
    $region14: #{tpu_custom_call.1} parent=1 // pred_check
      _
    $region15: #{tpu_custom_call.1} parent=1 // pred_check_branch
      %53 = sbr.rel (0) target = $region17
    $region16: #{tpu_custom_call.1} parent=1 // pred_region
      %s55 = ssub.s32 1024, 1024
      %56 = vsyncadd [#allocation9], %s55
      %s57 = sshll.u32 [#allocation8], 4
      %s58 = int_to_ptr.vmem [resolvable:$true] %s57
      %63 = dma.hbm_to_vmem [thread:$0]  %s3, 1024, %s58, [#allocation9], 64, 64, 4
    $region17: #{tpu_custom_call.1} parent=1 // pred_fallthru
      _
    // Predicated region
    $region18: #{tpu_custom_call.1} parent=1 // pred_check
      _
    $region19: #{tpu_custom_call.1} parent=1 // pred_check_branch
      %65 = sbr.rel (0) target = $region21
    $region20: #{tpu_custom_call.1} parent=1 // pred_region
      %s67 = ssub.s32 1024, 1024
      %68 = vsyncadd [#allocation9], %s67
      %s69 = sshll.u32 [#allocation10], 4
      %s70 = int_to_ptr.vmem [resolvable:$true] %s69
      %75 = dma.hbm_to_vmem [thread:$0]  %s4, 1024, %s70, [#allocation9], 64, 64, 4
    $region21: #{tpu_custom_call.1} parent=1 // pred_fallthru
      _
    // Predicated region
    $region22: #{tpu_custom_call.1} parent=1 // pred_check
      _
    $region23: #{tpu_custom_call.1} parent=1 // pred_check_branch
      %77 = sbr.rel (0) target = $region25
    $region24: #{tpu_custom_call.1} parent=1 // pred_region
      _
    $region25: #{tpu_custom_call.1} parent=1 // pred_fallthru
      _
    // Predicated region
    $region26: #{tpu_custom_call.1} parent=1 // pred_check
      _
    $region27: #{tpu_custom_call.1} parent=1 // pred_check_branch
      %79 = sbr.rel (0) target = $region29
    $region28: #{tpu_custom_call.1} parent=1 // pred_region
      _
    $region29: #{tpu_custom_call.1} parent=1 // pred_fallthru
      _
    // Predicated region
    $region30: #{tpu_custom_call.1} parent=1 // pred_check
      _
    $region31: #{tpu_custom_call.1} parent=1 // pred_check_branch
      %81 = sbr.rel (0) target = $region33
    $region32: #{tpu_custom_call.1} parent=1 // pred_region
      %82 = dma.done [#allocation3], 128
    $region33: #{tpu_custom_call.1} parent=1 // pred_fallthru
      _
    // Predicated region
    $region34: #{tpu_custom_call.1} parent=1 // pred_check
      _
    $region35: #{tpu_custom_call.1} parent=1 // pred_check_branch
      %84 = sbr.rel (0) target = $region37
    $region36: #{tpu_custom_call.1} parent=1 // pred_region
      %85 = dma.done [#allocation6], 384
    $region37: #{tpu_custom_call.1} parent=1 // pred_fallthru
      _
    // Predicated region
    $region38: #{tpu_custom_call.1} parent=1 // pred_check
      _
    $region39: #{tpu_custom_call.1} parent=1 // pred_check_branch
      %87 = sbr.rel (0) target = $region41
    $region40: #{tpu_custom_call.1} parent=1 // pred_region
      %88 = dma.done [#allocation6], 1024
    $region41: #{tpu_custom_call.1} parent=1 // pred_fallthru
      _
    // Predicated region
    $region42: #{tpu_custom_call.1} parent=1 // pred_check
      _
    $region43: #{tpu_custom_call.1} parent=1 // pred_check_branch
      %90 = sbr.rel (0) target = $region45
    $region44: #{tpu_custom_call.1} parent=1 // pred_region
      %91 = dma.done [#allocation9], 1024
    $region45: #{tpu_custom_call.1} parent=1 // pred_fallthru
      _
    // Predicated region
    $region46: #{tpu_custom_call.1} parent=1 // pred_check
      _
    $region47: #{tpu_custom_call.1} parent=1 // pred_check_branch
      %93 = sbr.rel (0) target = $region49
    $region48: #{tpu_custom_call.1} parent=1 // pred_region
      %94 = dma.done [#allocation9], 1024
    $region49: #{tpu_custom_call.1} parent=1 // pred_fallthru
      _
    %v96 = vld [vmem:[#allocation2] sm:$0xf]
    %v97 = vld [vmem:[#allocation2 + $0x4] sm:$0xf]
    %v98 = vld [vmem:[#allocation7] sm:$0xf]
    %v99 = vld [vmem:[#allocation7 + $0x4] sm:$0xf]
    %v100 = vld [vmem:[#allocation7 + $0x8] sm:$0xf]
    %v101 = vld [vmem:[#allocation7 + $0xc] sm:$0xf]
    %v102 = vld [vmem:[#allocation7 + $0x10] sm:$0xf]
    %v103 = vld [vmem:[#allocation7 + $0x14] sm:$0xf]
    %v104 = vld [vmem:[#allocation7 + $0x18] sm:$0xf]
    %v105 = vld [vmem:[#allocation7 + $0x1c] sm:$0xf]
    %v106 = vld [vmem:[#allocation7 + $0x20] sm:$0xf]
    %v107 = vld [vmem:[#allocation7 + $0x24] sm:$0xf]
    %v108 = vld [vmem:[#allocation7 + $0x28] sm:$0xf]
    %v109 = vld [vmem:[#allocation7 + $0x2c] sm:$0xf]
    %v110 = vld [vmem:[#allocation7 + $0x30] sm:$0xf]
    %v111 = vld [vmem:[#allocation7 + $0x34] sm:$0xf]
    %v112 = vld [vmem:[#allocation7 + $0x38] sm:$0xf]
    %v113 = vld [vmem:[#allocation7 + $0x3c] sm:$0xf]
    %v114 = vld [vmem:[%s5] sm:$0x1]
    %v116 = vlaneseq
    %v117 = vshrl.u32 %v116, 7
    %v118 = vsub.s32 0, %v117
    %v119 = vrot.slane %v114, %v118
    %v123 = vunpack.c.l.b16 %v96
    %v124 = vunpack.c.l.b16 %v97
    %v125 = vpack.c.b16 %v124, %v123
    %v143 = vunpack.c.l.b16 %v98
    %v144 = vunpack.c.l.b16 %v99
    %v145 = vunpack.c.l.b16 %v100
    %v146 = vunpack.c.l.b16 %v101
    %v147 = vunpack.c.l.b16 %v102
    %v148 = vunpack.c.l.b16 %v103
    %v149 = vunpack.c.l.b16 %v104
    %v150 = vunpack.c.l.b16 %v105
    %v151 = vunpack.c.l.b16 %v106
    %v152 = vunpack.c.l.b16 %v107
    %v153 = vunpack.c.l.b16 %v108
    %v154 = vunpack.c.l.b16 %v109
    %v155 = vunpack.c.l.b16 %v110
    %v156 = vunpack.c.l.b16 %v111
    %v157 = vunpack.c.l.b16 %v112
    %v158 = vunpack.c.l.b16 %v113
    %v159 = vpack.c.b16 %v144, %v143
    %v160 = vpack.c.b16 %v146, %v145
    %v161 = vpack.c.b16 %v148, %v147
    %v162 = vpack.c.b16 %v150, %v149
    %v163 = vpack.c.b16 %v152, %v151
    %v164 = vpack.c.b16 %v154, %v153
    %v165 = vpack.c.b16 %v156, %v155
    %v166 = vpack.c.b16 %v158, %v157
    %175 = vmatprep.subr.bf16.mxu0 0
    %176 = vmatpush1.bf16.msra.mxu0 %v159
    %177 = vmatprep.subr.bf16.mxu0 0
    %178 = vmatpush1.bf16.msra.mxu0 %v160
    %179 = vmatprep.subr.bf16.mxu0 0
    %180 = vmatpush1.bf16.msra.mxu0 %v161
    %181 = vmatprep.subr.bf16.mxu0 0
    %182 = vmatpush1.bf16.msra.mxu0 %v162
    %183 = vmatprep.subr.bf16.mxu0 0
    %184 = vmatpush1.bf16.msra.mxu0 %v163
    %185 = vmatprep.subr.bf16.mxu0 0
    %186 = vmatpush1.bf16.msra.mxu0 %v164
    %187 = vmatprep.subr.bf16.mxu0 0
    %188 = vmatpush1.bf16.msra.mxu0 %v165
    %189 = vmatprep.subr.bf16.mxu0 0
    %190 = vmatpush1.bf16.msra.mxu0 %v166
    %191 = vmatprep.subr.bf16.mxu0 0
    %192 = vmatpush1.bf16.msra.mxu0 0
    %193 = vmatprep.subr.bf16.mxu0 0
    %194 = vmatpush1.bf16.msra.mxu0 0
    %195 = vmatprep.subr.bf16.mxu0 0
    %196 = vmatpush1.bf16.msra.mxu0 0
    %197 = vmatprep.subr.bf16.mxu0 0
    %198 = vmatpush1.bf16.msra.mxu0 0
    %199 = vmatprep.subr.bf16.mxu0 0
    %200 = vmatpush1.bf16.msra.mxu0 0
    %201 = vmatprep.subr.bf16.mxu0 0
    %202 = vmatpush1.bf16.msra.mxu0 0
    %203 = vmatprep.subr.bf16.mxu0 0
    %204 = vmatpush1.bf16.msra.mxu0 0
    %205 = vmatprep.subr.bf16.mxu0 0
    %206 = vmatpush1.bf16.msra.mxu0 0
    %207 = vmatprep.mubr.bf16.mxu0 0
    %208 = vmatmul.mubr.bf16.gmra.mrb[0].mxu0 %v125
    %v209 = vpop.f32.mrb[0].mxu0
    %v210 = vadd.f32 %v119, %v209
    %v211 = vpop.f32.mrb[0].mxu0
    %v212 = vpop.f32.mrb[0].mxu0
    %v213 = vadd.f32 %v119, %v212
    %v214 = vpop.f32.mrb[0].mxu0
    %215 = vdwg.mxu0
    %v216 = vld [vmem:[%s6] sm:$0x1]
    %v217 = vld [vmem:[#allocation5] sm:$0xf]
    %v218 = vld [vmem:[#allocation5 + $0xc] sm:$0xf]
    %v219 = vmul.bf16 %v96, %v217
    %v220 = vmul.bf16 %v97, %v218
    %v221 = vld [vmem:[#allocation8] sm:$0xf]
    %v222 = vld [vmem:[#allocation8 + $0x4] sm:$0xf]
    %v223 = vld [vmem:[#allocation8 + $0x8] sm:$0xf]
    %v224 = vld [vmem:[#allocation8 + $0xc] sm:$0xf]
    %v225 = vld [vmem:[#allocation8 + $0x10] sm:$0xf]
    %v226 = vld [vmem:[#allocation8 + $0x14] sm:$0xf]
    %v227 = vld [vmem:[#allocation8 + $0x18] sm:$0xf]
    %v228 = vld [vmem:[#allocation8 + $0x1c] sm:$0xf]
    %v229 = vld [vmem:[#allocation8 + $0x20] sm:$0xf]
    %v230 = vld [vmem:[#allocation8 + $0x24] sm:$0xf]
    %v231 = vld [vmem:[#allocation8 + $0x28] sm:$0xf]
    %v232 = vld [vmem:[#allocation8 + $0x2c] sm:$0xf]
    %v233 = vld [vmem:[#allocation8 + $0x30] sm:$0xf]
    %v234 = vld [vmem:[#allocation8 + $0x34] sm:$0xf]
    %v235 = vld [vmem:[#allocation8 + $0x38] sm:$0xf]
    %v236 = vld [vmem:[#allocation8 + $0x3c] sm:$0xf]
    %v239 = vunpack.c.l.b16 %v217
    %v240 = vunpack.c.l.b16 %v218
    %v241 = vpack.c.b16 %v240, %v239
    %v259 = vunpack.c.l.b16 %v221
    %v260 = vunpack.c.l.b16 %v222
    %v261 = vunpack.c.l.b16 %v223
    %v262 = vunpack.c.l.b16 %v224
    %v263 = vunpack.c.l.b16 %v225
    %v264 = vunpack.c.l.b16 %v226
    %v265 = vunpack.c.l.b16 %v227
    %v266 = vunpack.c.l.b16 %v228
    %v267 = vunpack.c.l.b16 %v229
    %v268 = vunpack.c.l.b16 %v230
    %v269 = vunpack.c.l.b16 %v231
    %v270 = vunpack.c.l.b16 %v232
    %v271 = vunpack.c.l.b16 %v233
    %v272 = vunpack.c.l.b16 %v234
    %v273 = vunpack.c.l.b16 %v235
    %v274 = vunpack.c.l.b16 %v236
    %v275 = vpack.c.b16 %v260, %v259
    %v276 = vpack.c.b16 %v262, %v261
    %v277 = vpack.c.b16 %v264, %v263
    %v278 = vpack.c.b16 %v266, %v265
    %v279 = vpack.c.b16 %v268, %v267
    %v280 = vpack.c.b16 %v270, %v269
    %v281 = vpack.c.b16 %v272, %v271
    %v282 = vpack.c.b16 %v274, %v273
    %291 = vmatprep.subr.bf16.mxu0 0
    %292 = vmatpush1.bf16.msra.mxu0 %v275
    %293 = vmatprep.subr.bf16.mxu0 0
    %294 = vmatpush1.bf16.msra.mxu0 %v276
    %295 = vmatprep.subr.bf16.mxu0 0
    %296 = vmatpush1.bf16.msra.mxu0 %v277
    %297 = vmatprep.subr.bf16.mxu0 0
    %298 = vmatpush1.bf16.msra.mxu0 %v278
    %299 = vmatprep.subr.bf16.mxu0 0
    %300 = vmatpush1.bf16.msra.mxu0 %v279
    %301 = vmatprep.subr.bf16.mxu0 0
    %302 = vmatpush1.bf16.msra.mxu0 %v280
    %303 = vmatprep.subr.bf16.mxu0 0
    %304 = vmatpush1.bf16.msra.mxu0 %v281
    %305 = vmatprep.subr.bf16.mxu0 0
    %306 = vmatpush1.bf16.msra.mxu0 %v282
    %307 = vmatprep.subr.bf16.mxu0 0
    %308 = vmatpush1.bf16.msra.mxu0 0
    %309 = vmatprep.subr.bf16.mxu0 0
    %310 = vmatpush1.bf16.msra.mxu0 0
    %311 = vmatprep.subr.bf16.mxu0 0
    %312 = vmatpush1.bf16.msra.mxu0 0
    %313 = vmatprep.subr.bf16.mxu0 0
    %314 = vmatpush1.bf16.msra.mxu0 0
    %315 = vmatprep.subr.bf16.mxu0 0
    %316 = vmatpush1.bf16.msra.mxu0 0
    %317 = vmatprep.subr.bf16.mxu0 0
    %318 = vmatpush1.bf16.msra.mxu0 0
    %319 = vmatprep.subr.bf16.mxu0 0
    %320 = vmatpush1.bf16.msra.mxu0 0
    %321 = vmatprep.subr.bf16.mxu0 0
    %322 = vmatpush1.bf16.msra.mxu0 0
    %323 = vmatprep.mubr.bf16.mxu0 0
    %324 = vmatmul.mubr.bf16.gmra.mrb[0].mxu0 %v241
    %v325 = vpop.f32.mrb[0].mxu0
    %v326 = vadd.f32 0.0, %v325
    %v327 = vpop.f32.mrb[0].mxu0
    %v328 = vpop.f32.mrb[0].mxu0
    %v329 = vadd.f32 0.0, %v328
    %v330 = vpop.f32.mrb[0].mxu0
    %331 = vdwg.mxu0
    %v332 = vadd.f32 %v210, %v326
    %v333 = vadd.f32 %v213, %v329
    %v334 = vld [vmem:[#allocation10] sm:$0xf]
    %v335 = vld [vmem:[#allocation10 + $0x4] sm:$0xf]
    %v336 = vld [vmem:[#allocation10 + $0x8] sm:$0xf]
    %v337 = vld [vmem:[#allocation10 + $0xc] sm:$0xf]
    %v338 = vld [vmem:[#allocation10 + $0x10] sm:$0xf]
    %v339 = vld [vmem:[#allocation10 + $0x14] sm:$0xf]
    %v340 = vld [vmem:[#allocation10 + $0x18] sm:$0xf]
    %v341 = vld [vmem:[#allocation10 + $0x1c] sm:$0xf]
    %v342 = vld [vmem:[#allocation10 + $0x20] sm:$0xf]
    %v343 = vld [vmem:[#allocation10 + $0x24] sm:$0xf]
    %v344 = vld [vmem:[#allocation10 + $0x28] sm:$0xf]
    %v345 = vld [vmem:[#allocation10 + $0x2c] sm:$0xf]
    %v346 = vld [vmem:[#allocation10 + $0x30] sm:$0xf]
    %v347 = vld [vmem:[#allocation10 + $0x34] sm:$0xf]
    %v348 = vld [vmem:[#allocation10 + $0x38] sm:$0xf]
    %v349 = vld [vmem:[#allocation10 + $0x3c] sm:$0xf]
    %v352 = vunpack.c.l.b16 %v219
    %v353 = vunpack.c.l.b16 %v220
    %v354 = vpack.c.b16 %v353, %v352
    %v372 = vunpack.c.l.b16 %v334
    %v373 = vunpack.c.l.b16 %v335
    %v374 = vunpack.c.l.b16 %v336
    %v375 = vunpack.c.l.b16 %v337
    %v376 = vunpack.c.l.b16 %v338
    %v377 = vunpack.c.l.b16 %v339
    %v378 = vunpack.c.l.b16 %v340
    %v379 = vunpack.c.l.b16 %v341
    %v380 = vunpack.c.l.b16 %v342
    %v381 = vunpack.c.l.b16 %v343
    %v382 = vunpack.c.l.b16 %v344
    %v383 = vunpack.c.l.b16 %v345
    %v384 = vunpack.c.l.b16 %v346
    %v385 = vunpack.c.l.b16 %v347
    %v386 = vunpack.c.l.b16 %v348
    %v387 = vunpack.c.l.b16 %v349
    %v388 = vpack.c.b16 %v373, %v372
    %v389 = vpack.c.b16 %v375, %v374
    %v390 = vpack.c.b16 %v377, %v376
    %v391 = vpack.c.b16 %v379, %v378
    %v392 = vpack.c.b16 %v381, %v380
    %v393 = vpack.c.b16 %v383, %v382
    %v394 = vpack.c.b16 %v385, %v384
    %v395 = vpack.c.b16 %v387, %v386
    %404 = vmatprep.subr.bf16.mxu0 0
    %405 = vmatpush1.bf16.msra.mxu0 %v388
    %406 = vmatprep.subr.bf16.mxu0 0
    %407 = vmatpush1.bf16.msra.mxu0 %v389
    %408 = vmatprep.subr.bf16.mxu0 0
    %409 = vmatpush1.bf16.msra.mxu0 %v390
    %410 = vmatprep.subr.bf16.mxu0 0
    %411 = vmatpush1.bf16.msra.mxu0 %v391
    %412 = vmatprep.subr.bf16.mxu0 0
    %413 = vmatpush1.bf16.msra.mxu0 %v392
    %414 = vmatprep.subr.bf16.mxu0 0
    %415 = vmatpush1.bf16.msra.mxu0 %v393
    %416 = vmatprep.subr.bf16.mxu0 0
    %417 = vmatpush1.bf16.msra.mxu0 %v394
    %418 = vmatprep.subr.bf16.mxu0 0
    %419 = vmatpush1.bf16.msra.mxu0 %v395
    %420 = vmatprep.subr.bf16.mxu0 0
    %421 = vmatpush1.bf16.msra.mxu0 0
    %422 = vmatprep.subr.bf16.mxu0 0
    %423 = vmatpush1.bf16.msra.mxu0 0
    %424 = vmatprep.subr.bf16.mxu0 0
    %425 = vmatpush1.bf16.msra.mxu0 0
    %426 = vmatprep.subr.bf16.mxu0 0
    %427 = vmatpush1.bf16.msra.mxu0 0
    %428 = vmatprep.subr.bf16.mxu0 0
    %429 = vmatpush1.bf16.msra.mxu0 0
    %430 = vmatprep.subr.bf16.mxu0 0
    %431 = vmatpush1.bf16.msra.mxu0 0
    %432 = vmatprep.subr.bf16.mxu0 0
    %433 = vmatpush1.bf16.msra.mxu0 0
    %434 = vmatprep.subr.bf16.mxu0 0
    %435 = vmatpush1.bf16.msra.mxu0 0
    %436 = vmatprep.mubr.bf16.mxu0 0
    %437 = vmatmul.mubr.bf16.gmra.mrb[0].mxu0 %v354
    %v438 = vpop.f32.mrb[0].mxu0
    %v439 = vadd.f32 0.0, %v438
    %v440 = vpop.f32.mrb[0].mxu0
    %v441 = vpop.f32.mrb[0].mxu0
    %v442 = vadd.f32 0.0, %v441
    %v443 = vpop.f32.mrb[0].mxu0
    %444 = vdwg.mxu0
    %v445 = vadd.f32 %v332, %v439
    %v446 = vadd.f32 %v333, %v442
    %v447 = vtanh.pop %v445
    %v448 = vtanh.pop %v446
    %v450 = vlaneseq
    %v451 = vshrl.u32 %v450, 7
    %v452 = vsub.s32 0, %v451
    %v453 = vrot.slane %v216, %v452
    %v455 = vmul.f32 %v447, %v453
    %v456 = vmul.f32 %v448, %v453
    %457 = vadd.xlane.f32.xlu0 %v455
    %v458 = vpop.xlane.xlu0 %457
    %459 = vadd.xlane.f32.xlu0 %v456
    %v460 = vpop.xlane.xlu0 %459
    %v461 = vld [vmem:[#allocation5 + $0x4] sm:$0xf]
    %v462 = vld [vmem:[#allocation5 + $0x10] sm:$0xf]
    %v463 = vmul.bf16 %v96, %v461
    %v464 = vmul.bf16 %v97, %v462
    %v467 = vunpack.c.l.b16 %v461
    %v468 = vunpack.c.l.b16 %v462
    %v469 = vpack.c.b16 %v468, %v467
    %471 = vmatprep.subr.bf16.mxu0 0
    %472 = vmatpush1.bf16.msra.mxu0 %v275
    %473 = vmatprep.subr.bf16.mxu0 0
    %474 = vmatpush1.bf16.msra.mxu0 %v276
    %475 = vmatprep.subr.bf16.mxu0 0
    %476 = vmatpush1.bf16.msra.mxu0 %v277
    %477 = vmatprep.subr.bf16.mxu0 0
    %478 = vmatpush1.bf16.msra.mxu0 %v278
    %479 = vmatprep.subr.bf16.mxu0 0
    %480 = vmatpush1.bf16.msra.mxu0 %v279
    %481 = vmatprep.subr.bf16.mxu0 0
    %482 = vmatpush1.bf16.msra.mxu0 %v280
    %483 = vmatprep.subr.bf16.mxu0 0
    %484 = vmatpush1.bf16.msra.mxu0 %v281
    %485 = vmatprep.subr.bf16.mxu0 0
    %486 = vmatpush1.bf16.msra.mxu0 %v282
    %487 = vmatprep.subr.bf16.mxu0 0
    %488 = vmatpush1.bf16.msra.mxu0 0
    %489 = vmatprep.subr.bf16.mxu0 0
    %490 = vmatpush1.bf16.msra.mxu0 0
    %491 = vmatprep.subr.bf16.mxu0 0
    %492 = vmatpush1.bf16.msra.mxu0 0
    %493 = vmatprep.subr.bf16.mxu0 0
    %494 = vmatpush1.bf16.msra.mxu0 0
    %495 = vmatprep.subr.bf16.mxu0 0
    %496 = vmatpush1.bf16.msra.mxu0 0
    %497 = vmatprep.subr.bf16.mxu0 0
    %498 = vmatpush1.bf16.msra.mxu0 0
    %499 = vmatprep.subr.bf16.mxu0 0
    %500 = vmatpush1.bf16.msra.mxu0 0
    %501 = vmatprep.subr.bf16.mxu0 0
    %502 = vmatpush1.bf16.msra.mxu0 0
    %503 = vmatprep.mubr.bf16.mxu0 0
    %504 = vmatmul.mubr.bf16.gmra.mrb[0].mxu0 %v469
    %v505 = vpop.f32.mrb[0].mxu0
    %v506 = vadd.f32 0.0, %v505
    %v507 = vpop.f32.mrb[0].mxu0
    %v508 = vpop.f32.mrb[0].mxu0
    %v509 = vadd.f32 0.0, %v508
    %v510 = vpop.f32.mrb[0].mxu0
    %511 = vdwg.mxu0
    %v512 = vadd.f32 %v210, %v506
    %v513 = vadd.f32 %v213, %v509
    %v516 = vunpack.c.l.b16 %v463
    %v517 = vunpack.c.l.b16 %v464
    %v518 = vpack.c.b16 %v517, %v516
    %520 = vmatprep.subr.bf16.mxu0 0
    %521 = vmatpush1.bf16.msra.mxu0 %v388
    %522 = vmatprep.subr.bf16.mxu0 0
    %523 = vmatpush1.bf16.msra.mxu0 %v389
    %524 = vmatprep.subr.bf16.mxu0 0
    %525 = vmatpush1.bf16.msra.mxu0 %v390
    %526 = vmatprep.subr.bf16.mxu0 0
    %527 = vmatpush1.bf16.msra.mxu0 %v391
    %528 = vmatprep.subr.bf16.mxu0 0
    %529 = vmatpush1.bf16.msra.mxu0 %v392
    %530 = vmatprep.subr.bf16.mxu0 0
    %531 = vmatpush1.bf16.msra.mxu0 %v393
    %532 = vmatprep.subr.bf16.mxu0 0
    %533 = vmatpush1.bf16.msra.mxu0 %v394
    %534 = vmatprep.subr.bf16.mxu0 0
    %535 = vmatpush1.bf16.msra.mxu0 %v395
    %536 = vmatprep.subr.bf16.mxu0 0
    %537 = vmatpush1.bf16.msra.mxu0 0
    %538 = vmatprep.subr.bf16.mxu0 0
    %539 = vmatpush1.bf16.msra.mxu0 0
    %540 = vmatprep.subr.bf16.mxu0 0
    %541 = vmatpush1.bf16.msra.mxu0 0
    %542 = vmatprep.subr.bf16.mxu0 0
    %543 = vmatpush1.bf16.msra.mxu0 0
    %544 = vmatprep.subr.bf16.mxu0 0
    %545 = vmatpush1.bf16.msra.mxu0 0
    %546 = vmatprep.subr.bf16.mxu0 0
    %547 = vmatpush1.bf16.msra.mxu0 0
    %548 = vmatprep.subr.bf16.mxu0 0
    %549 = vmatpush1.bf16.msra.mxu0 0
    %550 = vmatprep.subr.bf16.mxu0 0
    %551 = vmatpush1.bf16.msra.mxu0 0
    %552 = vmatprep.mubr.bf16.mxu0 0
    %553 = vmatmul.mubr.bf16.gmra.mrb[0].mxu0 %v518
    %v554 = vpop.f32.mrb[0].mxu0
    %v555 = vadd.f32 0.0, %v554
    %v556 = vpop.f32.mrb[0].mxu0
    %v557 = vpop.f32.mrb[0].mxu0
    %v558 = vadd.f32 0.0, %v557
    %v559 = vpop.f32.mrb[0].mxu0
    %560 = vdwg.mxu0
    %v561 = vadd.f32 %v512, %v555
    %v562 = vadd.f32 %v513, %v558
    %v563 = vtanh.pop %v561
    %v564 = vtanh.pop %v562
    %v565 = vmul.f32 %v563, %v453
    %v566 = vmul.f32 %v564, %v453
    %567 = vadd.xlane.f32.xlu0 %v565
    %v568 = vpop.xlane.xlu0 %567
    %569 = vadd.xlane.f32.xlu0 %v566
    %v570 = vpop.xlane.xlu0 %569
    %v571 = vmax.f32 %v458, %v568
    %v572 = vmax.f32 %v460, %v570
    %v573 = vld [vmem:[#allocation5 + $0x8] sm:$0xf]
    %v574 = vld [vmem:[#allocation5 + $0x14] sm:$0xf]
    %v575 = vmul.bf16 %v96, %v573
    %v576 = vmul.bf16 %v97, %v574
    %v579 = vunpack.c.l.b16 %v573
    %v580 = vunpack.c.l.b16 %v574
    %v581 = vpack.c.b16 %v580, %v579
    %583 = vmatprep.subr.bf16.mxu0 0
    %584 = vmatpush1.bf16.msra.mxu0 %v275
    %585 = vmatprep.subr.bf16.mxu0 0
    %586 = vmatpush1.bf16.msra.mxu0 %v276
    %587 = vmatprep.subr.bf16.mxu0 0
    %588 = vmatpush1.bf16.msra.mxu0 %v277
    %589 = vmatprep.subr.bf16.mxu0 0
    %590 = vmatpush1.bf16.msra.mxu0 %v278
    %591 = vmatprep.subr.bf16.mxu0 0
    %592 = vmatpush1.bf16.msra.mxu0 %v279
    %593 = vmatprep.subr.bf16.mxu0 0
    %594 = vmatpush1.bf16.msra.mxu0 %v280
    %595 = vmatprep.subr.bf16.mxu0 0
    %596 = vmatpush1.bf16.msra.mxu0 %v281
    %597 = vmatprep.subr.bf16.mxu0 0
    %598 = vmatpush1.bf16.msra.mxu0 %v282
    %599 = vmatprep.subr.bf16.mxu0 0
    %600 = vmatpush1.bf16.msra.mxu0 0
    %601 = vmatprep.subr.bf16.mxu0 0
    %602 = vmatpush1.bf16.msra.mxu0 0
    %603 = vmatprep.subr.bf16.mxu0 0
    %604 = vmatpush1.bf16.msra.mxu0 0
    %605 = vmatprep.subr.bf16.mxu0 0
    %606 = vmatpush1.bf16.msra.mxu0 0
    %607 = vmatprep.subr.bf16.mxu0 0
    %608 = vmatpush1.bf16.msra.mxu0 0
    %609 = vmatprep.subr.bf16.mxu0 0
    %610 = vmatpush1.bf16.msra.mxu0 0
    %611 = vmatprep.subr.bf16.mxu0 0
    %612 = vmatpush1.bf16.msra.mxu0 0
    %613 = vmatprep.subr.bf16.mxu0 0
    %614 = vmatpush1.bf16.msra.mxu0 0
    %615 = vmatprep.mubr.bf16.mxu0 0
    %616 = vmatmul.mubr.bf16.gmra.mrb[0].mxu0 %v581
    %v617 = vpop.f32.mrb[0].mxu0
    %v618 = vadd.f32 0.0, %v617
    %v619 = vpop.f32.mrb[0].mxu0
    %v620 = vpop.f32.mrb[0].mxu0
    %v621 = vadd.f32 0.0, %v620
    %v622 = vpop.f32.mrb[0].mxu0
    %623 = vdwg.mxu0
    %v624 = vadd.f32 %v210, %v618
    %v625 = vadd.f32 %v213, %v621
    %v628 = vunpack.c.l.b16 %v575
    %v629 = vunpack.c.l.b16 %v576
    %v630 = vpack.c.b16 %v629, %v628
    %632 = vmatprep.subr.bf16.mxu0 0
    %633 = vmatpush1.bf16.msra.mxu0 %v388
    %634 = vmatprep.subr.bf16.mxu0 0
    %635 = vmatpush1.bf16.msra.mxu0 %v389
    %636 = vmatprep.subr.bf16.mxu0 0
    %637 = vmatpush1.bf16.msra.mxu0 %v390
    %638 = vmatprep.subr.bf16.mxu0 0
    %639 = vmatpush1.bf16.msra.mxu0 %v391
    %640 = vmatprep.subr.bf16.mxu0 0
    %641 = vmatpush1.bf16.msra.mxu0 %v392
    %642 = vmatprep.subr.bf16.mxu0 0
    %643 = vmatpush1.bf16.msra.mxu0 %v393
    %644 = vmatprep.subr.bf16.mxu0 0
    %645 = vmatpush1.bf16.msra.mxu0 %v394
    %646 = vmatprep.subr.bf16.mxu0 0
    %647 = vmatpush1.bf16.msra.mxu0 %v395
    %648 = vmatprep.subr.bf16.mxu0 0
    %649 = vmatpush1.bf16.msra.mxu0 0
    %650 = vmatprep.subr.bf16.mxu0 0
    %651 = vmatpush1.bf16.msra.mxu0 0
    %652 = vmatprep.subr.bf16.mxu0 0
    %653 = vmatpush1.bf16.msra.mxu0 0
    %654 = vmatprep.subr.bf16.mxu0 0
    %655 = vmatpush1.bf16.msra.mxu0 0
    %656 = vmatprep.subr.bf16.mxu0 0
    %657 = vmatpush1.bf16.msra.mxu0 0
    %658 = vmatprep.subr.bf16.mxu0 0
    %659 = vmatpush1.bf16.msra.mxu0 0
    %660 = vmatprep.subr.bf16.mxu0 0
    %661 = vmatpush1.bf16.msra.mxu0 0
    %662 = vmatprep.subr.bf16.mxu0 0
    %663 = vmatpush1.bf16.msra.mxu0 0
    %664 = vmatprep.mubr.bf16.mxu0 0
    %665 = vmatmul.mubr.bf16.gmra.mrb[0].mxu0 %v630
    %v666 = vpop.f32.mrb[0].mxu0
    %v667 = vadd.f32 0.0, %v666
    %v668 = vpop.f32.mrb[0].mxu0
    %v669 = vpop.f32.mrb[0].mxu0
    %v670 = vadd.f32 0.0, %v669
    %v671 = vpop.f32.mrb[0].mxu0
    %672 = vdwg.mxu0
    %v673 = vadd.f32 %v624, %v667
    %v674 = vadd.f32 %v625, %v670
    %v675 = vtanh.pop %v673
    %v676 = vtanh.pop %v674
    %v677 = vmul.f32 %v675, %v453
    %v678 = vmul.f32 %v676, %v453
    %679 = vadd.xlane.f32.xlu0 %v677
    %v680 = vpop.xlane.xlu0 %679
    %681 = vadd.xlane.f32.xlu0 %v678
    %v682 = vpop.xlane.xlu0 %681
    %v683 = vmax.f32 %v571, %v680
    %v684 = vmax.f32 %v572, %v682
    %685 = vst [vmem:[#allocation11] sm:$0xff] %v683
    %686 = vst [vmem:[#allocation11 + $0x8] sm:$0xff] %v684
    // Predicated region
    $region50: #{tpu_custom_call.1} parent=1 // pred_check
      _
    $region51: #{tpu_custom_call.1} parent=1 // pred_check_branch
      %688 = sbr.rel (0) target = $region53
    $region52: #{tpu_custom_call.1} parent=1 // pred_region
      %s690 = ssub.s32 256, 256
      %691 = vsyncadd [#allocation4], %s690
      %s692 = sshll.u32 [#allocation11], 4
      %s693 = int_to_ptr.vmem [resolvable:$true] %s692
      %698 = dma.vmem_to_hbm [thread:$0]  %s693, 256, %s7, [#allocation4], 128, 128, 8
    $region53: #{tpu_custom_call.1} parent=1 // pred_fallthru
      _
    // Predicated region
    $region54: #{tpu_custom_call.1} parent=1 // pred_check
      _
    $region55: #{tpu_custom_call.1} parent=1 // pred_check_branch
      %700 = sbr.rel (0) target = $region57
    $region56: #{tpu_custom_call.1} parent=1 // pred_region
      %701 = dma.done [#allocation4], 256
    $region57: #{tpu_custom_call.1} parent=1 // pred_fallthru
      _
    %702 = vsyncpa [#allocation3], 1
    %703 = vsyncpa [#allocation6], 1
    %704 = vsyncpa [#allocation9], 1
    %705 = vsyncpa [#allocation4], 1

// kernel: tpu_custom_call.1
$region0: #{tpu_custom_call.1}
  #allocation0 [shape = 'u32[]', space=smem, size = 0x4, offset = 0x4, fixed_abs, tag = 'smem constant byte address 0x4 - core index']
  #allocation1 [shape = 'u32[144,128]{1,0:T(1,128)}', space=vmem, size = 0x12000, scoped, tag = 'internal scratch']
  %s0 = inlined_call_operand.hbm [shape: bf16[16,128], index: 0, kind: input, shape index: {}]
  %s1 = inlined_call_operand.hbm [shape: bf16[16,384], index: 1, kind: input, shape index: {}]
  %s2 = inlined_call_operand.hbm [shape: bf16[128,128], index: 2, kind: input, shape index: {}]
  %s3 = inlined_call_operand.hbm [shape: bf16[128,128], index: 3, kind: input, shape index: {}]
  %s4 = inlined_call_operand.hbm [shape: bf16[128,128], index: 4, kind: input, shape index: {}]
  %s5 = inlined_call_operand.vmem [shape: f32[1,128], index: 5, kind: input, shape index: {}]
  %s6 = inlined_call_operand.vmem [shape: f32[1,128], index: 6, kind: input, shape index: {}]
  %s7 = inlined_call_operand.hbm [shape: f32[16,128], index: 7, kind: output, shape index: {}]
  %s8 = sld [smem:[#allocation0]]
  $region58: #{tpu_custom_call.1} parent=0
    _
  %s10 = ssub.s32 1, %s8
  %s11 = scalar_select 0, %s10, %s8
  $region1: #{tpu_custom_call.1} parent=0
    #allocation2 [shape = 'u8[4096]{0}', space=vmem, size = 0x1000, scoped, tag = 'input window, operand 0, single buffered']
    #allocation3 [shape = 's32[1]{0}', space=sflag, size = 0x4, scoped, tag = 'scoped memory for tpu_custom_call.1']
    #allocation4 [shape = 's32[1]{0}', space=sflag, size = 0x4, scoped, tag = 'scoped memory for tpu_custom_call.1']
    #allocation5 [shape = 'u8[12288]{0}', space=vmem, size = 0x3000, scoped, tag = 'input window, operand 1, single buffered']
    #allocation6 [shape = 's32[1]{0}', space=sflag, size = 0x4, scoped, tag = 'scoped memory for tpu_custom_call.1']
    #allocation7 [shape = 'u8[32768]{0}', space=vmem, size = 0x8000, scoped, tag = 'input window, operand 2, single buffered']
    #allocation8 [shape = 'u8[32768]{0}', space=vmem, size = 0x8000, scoped, tag = 'input window, operand 3, single buffered']
    #allocation9 [shape = 's32[1]{0}', space=sflag, size = 0x4, scoped, tag = 'scoped memory for tpu_custom_call.1']
    #allocation10 [shape = 'u8[32768]{0}', space=vmem, size = 0x8000, scoped, tag = 'input window, operand 4, single buffered']
    #allocation11 [shape = 'u8[8192]{0}', space=vmem, size = 0x2000, scoped, tag = 'output window, operand 0, single buffered']
    %12 = vsyncpa [#allocation3], 0
    %13 = vsyncpa [#allocation6], 0
    %14 = vsyncpa [#allocation9], 0
    %15 = vsyncpa [#allocation4], 0
    // Predicated region
    $region2: #{tpu_custom_call.1} parent=1 // pred_check
      _
    $region3: #{tpu_custom_call.1} parent=1 // pred_check_branch
      %17 = sbr.rel (0) target = $region5
    $region4: #{tpu_custom_call.1} parent=1 // pred_region
      %s19 = ssub.s32 128, 128
      %20 = vsyncadd [#allocation3], %s19
      %s21 = sshll.u32 [#allocation2], 4
      %s22 = int_to_ptr.vmem [resolvable:$true] %s21
      %27 = dma.hbm_to_vmem [thread:$0]  %s0, 128, %s22, [#allocation3], 64, 64, 4
    $region5: #{tpu_custom_call.1} parent=1 // pred_fallthru
      _
    // Predicated region
    $region6: #{tpu_custom_call.1} parent=1 // pred_check
      _
    $region7: #{tpu_custom_call.1} parent=1 // pred_check_branch
      %29 = sbr.rel (0) target = $region9
    $region8: #{tpu_custom_call.1} parent=1 // pred_region
      %s31 = ssub.s32 384, 384
      %32 = vsyncadd [#allocation6], %s31
      %s33 = sshll.u32 [#allocation5], 4
      %s34 = int_to_ptr.vmem [resolvable:$true] %s33
      %39 = dma.hbm_to_vmem [thread:$0]  %s1, 384, %s34, [#allocation6], 192, 192, 12
    $region9: #{tpu_custom_call.1} parent=1 // pred_fallthru
      _
    // Predicated region
    $region10: #{tpu_custom_call.1} parent=1 // pred_check
      _
    $region11: #{tpu_custom_call.1} parent=1 // pred_check_branch
      %41 = sbr.rel (0) target = $region13
    $region12: #{tpu_custom_call.1} parent=1 // pred_region
      %s43 = ssub.s32 1024, 1024
      %44 = vsyncadd [#allocation6], %s43
      %s45 = sshll.u32 [#allocation7], 4
      %s46 = int_to_ptr.vmem [resolvable:$true] %s45
      %51 = dma.hbm_to_vmem [thread:$0]  %s2, 1024, %s46, [#allocation6], 64, 64, 4
    $region13: #{tpu_custom_call.1} parent=1 // pred_fallthru
      _
    // Predicated region
    $region14: #{tpu_custom_call.1} parent=1 // pred_check
      _
    $region15: #{tpu_custom_call.1} parent=1 // pred_check_branch
      %53 = sbr.rel (0) target = $region17
    $region16: #{tpu_custom_call.1} parent=1 // pred_region
      %s55 = ssub.s32 1024, 1024
      %56 = vsyncadd [#allocation9], %s55
      %s57 = sshll.u32 [#allocation8], 4
      %s58 = int_to_ptr.vmem [resolvable:$true] %s57
      %63 = dma.hbm_to_vmem [thread:$0]  %s3, 1024, %s58, [#allocation9], 64, 64, 4
    $region17: #{tpu_custom_call.1} parent=1 // pred_fallthru
      _
    // Predicated region
    $region18: #{tpu_custom_call.1} parent=1 // pred_check
      _
    $region19: #{tpu_custom_call.1} parent=1 // pred_check_branch
      %65 = sbr.rel (0) target = $region21
    $region20: #{tpu_custom_call.1} parent=1 // pred_region
      %s67 = ssub.s32 1024, 1024
      %68 = vsyncadd [#allocation9], %s67
      %s69 = sshll.u32 [#allocation10], 4
      %s70 = int_to_ptr.vmem [resolvable:$true] %s69
      %75 = dma.hbm_to_vmem [thread:$0]  %s4, 1024, %s70, [#allocation9], 64, 64, 4
    $region21: #{tpu_custom_call.1} parent=1 // pred_fallthru
      _
    // Predicated region
    $region22: #{tpu_custom_call.1} parent=1 // pred_check
      _
    $region23: #{tpu_custom_call.1} parent=1 // pred_check_branch
      %77 = sbr.rel (0) target = $region25
    $region24: #{tpu_custom_call.1} parent=1 // pred_region
      _
    $region25: #{tpu_custom_call.1} parent=1 // pred_fallthru
      _
    // Predicated region
    $region26: #{tpu_custom_call.1} parent=1 // pred_check
      _
    $region27: #{tpu_custom_call.1} parent=1 // pred_check_branch
      %79 = sbr.rel (0) target = $region29
    $region28: #{tpu_custom_call.1} parent=1 // pred_region
      _
    $region29: #{tpu_custom_call.1} parent=1 // pred_fallthru
      _
    // Predicated region
    $region30: #{tpu_custom_call.1} parent=1 // pred_check
      _
    $region31: #{tpu_custom_call.1} parent=1 // pred_check_branch
      %81 = sbr.rel (0) target = $region33
    $region32: #{tpu_custom_call.1} parent=1 // pred_region
      %82 = dma.done [#allocation3], 128
    $region33: #{tpu_custom_call.1} parent=1 // pred_fallthru
      _
    // Predicated region
    $region34: #{tpu_custom_call.1} parent=1 // pred_check
      _
    $region35: #{tpu_custom_call.1} parent=1 // pred_check_branch
      %84 = sbr.rel (0) target = $region37
    $region36: #{tpu_custom_call.1} parent=1 // pred_region
      %85 = dma.done [#allocation6], 384
    $region37: #{tpu_custom_call.1} parent=1 // pred_fallthru
      _
    // Predicated region
    $region38: #{tpu_custom_call.1} parent=1 // pred_check
      _
    $region39: #{tpu_custom_call.1} parent=1 // pred_check_branch
      %87 = sbr.rel (0) target = $region41
    $region40: #{tpu_custom_call.1} parent=1 // pred_region
      %88 = dma.done [#allocation6], 1024
    $region41: #{tpu_custom_call.1} parent=1 // pred_fallthru
      _
    // Predicated region
    $region42: #{tpu_custom_call.1} parent=1 // pred_check
      _
    $region43: #{tpu_custom_call.1} parent=1 // pred_check_branch
      %90 = sbr.rel (0) target = $region45
    $region44: #{tpu_custom_call.1} parent=1 // pred_region
      %91 = dma.done [#allocation9], 1024
    $region45: #{tpu_custom_call.1} parent=1 // pred_fallthru
      _
    // Predicated region
    $region46: #{tpu_custom_call.1} parent=1 // pred_check
      _
    $region47: #{tpu_custom_call.1} parent=1 // pred_check_branch
      %93 = sbr.rel (0) target = $region49
    $region48: #{tpu_custom_call.1} parent=1 // pred_region
      %94 = dma.done [#allocation9], 1024
    $region49: #{tpu_custom_call.1} parent=1 // pred_fallthru
      _
    %v96 = vld [vmem:[#allocation2] sm:$0xf]
    %v97 = vld [vmem:[#allocation2 + $0x4] sm:$0xf]
    %v98 = vld [vmem:[#allocation7] sm:$0xf]
    %v99 = vld [vmem:[#allocation7 + $0x4] sm:$0xf]
    %v100 = vld [vmem:[#allocation7 + $0x8] sm:$0xf]
    %v101 = vld [vmem:[#allocation7 + $0xc] sm:$0xf]
    %v102 = vld [vmem:[#allocation7 + $0x10] sm:$0xf]
    %v103 = vld [vmem:[#allocation7 + $0x14] sm:$0xf]
    %v104 = vld [vmem:[#allocation7 + $0x18] sm:$0xf]
    %v105 = vld [vmem:[#allocation7 + $0x1c] sm:$0xf]
    %v106 = vld [vmem:[#allocation7 + $0x20] sm:$0xf]
    %v107 = vld [vmem:[#allocation7 + $0x24] sm:$0xf]
    %v108 = vld [vmem:[#allocation7 + $0x28] sm:$0xf]
    %v109 = vld [vmem:[#allocation7 + $0x2c] sm:$0xf]
    %v110 = vld [vmem:[#allocation7 + $0x30] sm:$0xf]
    %v111 = vld [vmem:[#allocation7 + $0x34] sm:$0xf]
    %v112 = vld [vmem:[#allocation7 + $0x38] sm:$0xf]
    %v113 = vld [vmem:[#allocation7 + $0x3c] sm:$0xf]
    %v114 = vld [vmem:[%s5] sm:$0x1]
    %v116 = vlaneseq
    %v117 = vshrl.u32 %v116, 7
    %v118 = vsub.s32 0, %v117
    %v119 = vrot.slane %v114, %v118
    %v123 = vunpack.c.l.b16 %v96
    %v124 = vunpack.c.l.b16 %v97
    %v125 = vpack.c.b16 %v124, %v123
    %v143 = vunpack.c.l.b16 %v98
    %v144 = vunpack.c.l.b16 %v99
    %v145 = vunpack.c.l.b16 %v100
    %v146 = vunpack.c.l.b16 %v101
    %v147 = vunpack.c.l.b16 %v102
    %v148 = vunpack.c.l.b16 %v103
    %v149 = vunpack.c.l.b16 %v104
    %v150 = vunpack.c.l.b16 %v105
    %v151 = vunpack.c.l.b16 %v106
    %v152 = vunpack.c.l.b16 %v107
    %v153 = vunpack.c.l.b16 %v108
    %v154 = vunpack.c.l.b16 %v109
    %v155 = vunpack.c.l.b16 %v110
    %v156 = vunpack.c.l.b16 %v111
    %v157 = vunpack.c.l.b16 %v112
    %v158 = vunpack.c.l.b16 %v113
    %v159 = vpack.c.b16 %v144, %v143
    %v160 = vpack.c.b16 %v146, %v145
    %v161 = vpack.c.b16 %v148, %v147
    %v162 = vpack.c.b16 %v150, %v149
    %v163 = vpack.c.b16 %v152, %v151
    %v164 = vpack.c.b16 %v154, %v153
    %v165 = vpack.c.b16 %v156, %v155
    %v166 = vpack.c.b16 %v158, %v157
    %175 = vmatprep.subr.bf16.mxu0 0
    %176 = vmatpush1.bf16.msra.mxu0 %v159
    %177 = vmatprep.subr.bf16.mxu0 0
    %178 = vmatpush1.bf16.msra.mxu0 %v160
    %179 = vmatprep.subr.bf16.mxu0 0
    %180 = vmatpush1.bf16.msra.mxu0 %v161
    %181 = vmatprep.subr.bf16.mxu0 0
    %182 = vmatpush1.bf16.msra.mxu0 %v162
    %183 = vmatprep.subr.bf16.mxu0 0
    %184 = vmatpush1.bf16.msra.mxu0 %v163
    %185 = vmatprep.subr.bf16.mxu0 0
    %186 = vmatpush1.bf16.msra.mxu0 %v164
    %187 = vmatprep.subr.bf16.mxu0 0
    %188 = vmatpush1.bf16.msra.mxu0 %v165
    %189 = vmatprep.subr.bf16.mxu0 0
    %190 = vmatpush1.bf16.msra.mxu0 %v166
    %191 = vmatprep.subr.bf16.mxu0 0
    %192 = vmatpush1.bf16.msra.mxu0 0
    %193 = vmatprep.subr.bf16.mxu0 0
    %194 = vmatpush1.bf16.msra.mxu0 0
    %195 = vmatprep.subr.bf16.mxu0 0
    %196 = vmatpush1.bf16.msra.mxu0 0
    %197 = vmatprep.subr.bf16.mxu0 0
    %198 = vmatpush1.bf16.msra.mxu0 0
    %199 = vmatprep.subr.bf16.mxu0 0
    %200 = vmatpush1.bf16.msra.mxu0 0
    %201 = vmatprep.subr.bf16.mxu0 0
    %202 = vmatpush1.bf16.msra.mxu0 0
    %203 = vmatprep.subr.bf16.mxu0 0
    %204 = vmatpush1.bf16.msra.mxu0 0
    %205 = vmatprep.subr.bf16.mxu0 0
    %206 = vmatpush1.bf16.msra.mxu0 0
    %207 = vmatprep.mubr.bf16.mxu0 0
    %208 = vmatmul.mubr.bf16.gmra.mrb[0].mxu0 %v125
    %v209 = vpop.f32.mrb[0].mxu0
    %v210 = vadd.f32 %v119, %v209
    %v211 = vpop.f32.mrb[0].mxu0
    %v212 = vpop.f32.mrb[0].mxu0
    %v213 = vadd.f32 %v119, %v212
    %v214 = vpop.f32.mrb[0].mxu0
    %215 = vdwg.mxu0
    %v216 = vld [vmem:[%s6] sm:$0x1]
    %v217 = vld [vmem:[#allocation5] sm:$0xf]
    %v218 = vld [vmem:[#allocation5 + $0xc] sm:$0xf]
    %v219 = vmul.bf16 %v96, %v217
    %v220 = vmul.bf16 %v97, %v218
    %v221 = vld [vmem:[#allocation8] sm:$0xf]
    %v222 = vld [vmem:[#allocation8 + $0x4] sm:$0xf]
    %v223 = vld [vmem:[#allocation8 + $0x8] sm:$0xf]
    %v224 = vld [vmem:[#allocation8 + $0xc] sm:$0xf]
    %v225 = vld [vmem:[#allocation8 + $0x10] sm:$0xf]
    %v226 = vld [vmem:[#allocation8 + $0x14] sm:$0xf]
    %v227 = vld [vmem:[#allocation8 + $0x18] sm:$0xf]
    %v228 = vld [vmem:[#allocation8 + $0x1c] sm:$0xf]
    %v229 = vld [vmem:[#allocation8 + $0x20] sm:$0xf]
    %v230 = vld [vmem:[#allocation8 + $0x24] sm:$0xf]
    %v231 = vld [vmem:[#allocation8 + $0x28] sm:$0xf]
    %v232 = vld [vmem:[#allocation8 + $0x2c] sm:$0xf]
    %v233 = vld [vmem:[#allocation8 + $0x30] sm:$0xf]
    %v234 = vld [vmem:[#allocation8 + $0x34] sm:$0xf]
    %v235 = vld [vmem:[#allocation8 + $0x38] sm:$0xf]
    %v236 = vld [vmem:[#allocation8 + $0x3c] sm:$0xf]
    %v239 = vunpack.c.l.b16 %v217
    %v240 = vunpack.c.l.b16 %v218
    %v241 = vpack.c.b16 %v240, %v239
    %v259 = vunpack.c.l.b16 %v221
    %v260 = vunpack.c.l.b16 %v222
    %v261 = vunpack.c.l.b16 %v223
    %v262 = vunpack.c.l.b16 %v224
    %v263 = vunpack.c.l.b16 %v225
    %v264 = vunpack.c.l.b16 %v226
    %v265 = vunpack.c.l.b16 %v227
    %v266 = vunpack.c.l.b16 %v228
    %v267 = vunpack.c.l.b16 %v229
    %v268 = vunpack.c.l.b16 %v230
    %v269 = vunpack.c.l.b16 %v231
    %v270 = vunpack.c.l.b16 %v232
    %v271 = vunpack.c.l.b16 %v233
    %v272 = vunpack.c.l.b16 %v234
    %v273 = vunpack.c.l.b16 %v235
    %v274 = vunpack.c.l.b16 %v236
    %v275 = vpack.c.b16 %v260, %v259
    %v276 = vpack.c.b16 %v262, %v261
    %v277 = vpack.c.b16 %v264, %v263
    %v278 = vpack.c.b16 %v266, %v265
    %v279 = vpack.c.b16 %v268, %v267
    %v280 = vpack.c.b16 %v270, %v269
    %v281 = vpack.c.b16 %v272, %v271
    %v282 = vpack.c.b16 %v274, %v273
    %291 = vmatprep.subr.bf16.mxu0 0
    %292 = vmatpush1.bf16.msra.mxu0 %v275
    %293 = vmatprep.subr.bf16.mxu0 0
    %294 = vmatpush1.bf16.msra.mxu0 %v276
    %295 = vmatprep.subr.bf16.mxu0 0
    %296 = vmatpush1.bf16.msra.mxu0 %v277
    %297 = vmatprep.subr.bf16.mxu0 0
    %298 = vmatpush1.bf16.msra.mxu0 %v278
    %299 = vmatprep.subr.bf16.mxu0 0
    %300 = vmatpush1.bf16.msra.mxu0 %v279
    %301 = vmatprep.subr.bf16.mxu0 0
    %302 = vmatpush1.bf16.msra.mxu0 %v280
    %303 = vmatprep.subr.bf16.mxu0 0
    %304 = vmatpush1.bf16.msra.mxu0 %v281
    %305 = vmatprep.subr.bf16.mxu0 0
    %306 = vmatpush1.bf16.msra.mxu0 %v282
    %307 = vmatprep.subr.bf16.mxu0 0
    %308 = vmatpush1.bf16.msra.mxu0 0
    %309 = vmatprep.subr.bf16.mxu0 0
    %310 = vmatpush1.bf16.msra.mxu0 0
    %311 = vmatprep.subr.bf16.mxu0 0
    %312 = vmatpush1.bf16.msra.mxu0 0
    %313 = vmatprep.subr.bf16.mxu0 0
    %314 = vmatpush1.bf16.msra.mxu0 0
    %315 = vmatprep.subr.bf16.mxu0 0
    %316 = vmatpush1.bf16.msra.mxu0 0
    %317 = vmatprep.subr.bf16.mxu0 0
    %318 = vmatpush1.bf16.msra.mxu0 0
    %319 = vmatprep.subr.bf16.mxu0 0
    %320 = vmatpush1.bf16.msra.mxu0 0
    %321 = vmatprep.subr.bf16.mxu0 0
    %322 = vmatpush1.bf16.msra.mxu0 0
    %323 = vmatprep.mubr.bf16.mxu0 0
    %324 = vmatmul.mubr.bf16.gmra.mrb[0].mxu0 %v241
    %v325 = vpop.f32.mrb[0].mxu0
    %v326 = vadd.f32 0.0, %v325
    %v327 = vpop.f32.mrb[0].mxu0
    %v328 = vpop.f32.mrb[0].mxu0
    %v329 = vadd.f32 0.0, %v328
    %v330 = vpop.f32.mrb[0].mxu0
    %331 = vdwg.mxu0
    %v332 = vadd.f32 %v210, %v326
    %v333 = vadd.f32 %v213, %v329
    %v334 = vld [vmem:[#allocation10] sm:$0xf]
    %v335 = vld [vmem:[#allocation10 + $0x4] sm:$0xf]
    %v336 = vld [vmem:[#allocation10 + $0x8] sm:$0xf]
    %v337 = vld [vmem:[#allocation10 + $0xc] sm:$0xf]
    %v338 = vld [vmem:[#allocation10 + $0x10] sm:$0xf]
    %v339 = vld [vmem:[#allocation10 + $0x14] sm:$0xf]
    %v340 = vld [vmem:[#allocation10 + $0x18] sm:$0xf]
    %v341 = vld [vmem:[#allocation10 + $0x1c] sm:$0xf]
    %v342 = vld [vmem:[#allocation10 + $0x20] sm:$0xf]
    %v343 = vld [vmem:[#allocation10 + $0x24] sm:$0xf]
    %v344 = vld [vmem:[#allocation10 + $0x28] sm:$0xf]
    %v345 = vld [vmem:[#allocation10 + $0x2c] sm:$0xf]
    %v346 = vld [vmem:[#allocation10 + $0x30] sm:$0xf]
    %v347 = vld [vmem:[#allocation10 + $0x34] sm:$0xf]
    %v348 = vld [vmem:[#allocation10 + $0x38] sm:$0xf]
    %v349 = vld [vmem:[#allocation10 + $0x3c] sm:$0xf]
    %v352 = vunpack.c.l.b16 %v219
    %v353 = vunpack.c.l.b16 %v220
    %v354 = vpack.c.b16 %v353, %v352
    %v372 = vunpack.c.l.b16 %v334
    %v373 = vunpack.c.l.b16 %v335
    %v374 = vunpack.c.l.b16 %v336
    %v375 = vunpack.c.l.b16 %v337
    %v376 = vunpack.c.l.b16 %v338
    %v377 = vunpack.c.l.b16 %v339
    %v378 = vunpack.c.l.b16 %v340
    %v379 = vunpack.c.l.b16 %v341
    %v380 = vunpack.c.l.b16 %v342
    %v381 = vunpack.c.l.b16 %v343
    %v382 = vunpack.c.l.b16 %v344
    %v383 = vunpack.c.l.b16 %v345
    %v384 = vunpack.c.l.b16 %v346
    %v385 = vunpack.c.l.b16 %v347
    %v386 = vunpack.c.l.b16 %v348
    %v387 = vunpack.c.l.b16 %v349
    %v388 = vpack.c.b16 %v373, %v372
    %v389 = vpack.c.b16 %v375, %v374
    %v390 = vpack.c.b16 %v377, %v376
    %v391 = vpack.c.b16 %v379, %v378
    %v392 = vpack.c.b16 %v381, %v380
    %v393 = vpack.c.b16 %v383, %v382
    %v394 = vpack.c.b16 %v385, %v384
    %v395 = vpack.c.b16 %v387, %v386
    %404 = vmatprep.subr.bf16.mxu0 0
    %405 = vmatpush1.bf16.msra.mxu0 %v388
    %406 = vmatprep.subr.bf16.mxu0 0
    %407 = vmatpush1.bf16.msra.mxu0 %v389
    %408 = vmatprep.subr.bf16.mxu0 0
    %409 = vmatpush1.bf16.msra.mxu0 %v390
    %410 = vmatprep.subr.bf16.mxu0 0
    %411 = vmatpush1.bf16.msra.mxu0 %v391
    %412 = vmatprep.subr.bf16.mxu0 0
    %413 = vmatpush1.bf16.msra.mxu0 %v392
    %414 = vmatprep.subr.bf16.mxu0 0
    %415 = vmatpush1.bf16.msra.mxu0 %v393
    %416 = vmatprep.subr.bf16.mxu0 0
    %417 = vmatpush1.bf16.msra.mxu0 %v394
    %418 = vmatprep.subr.bf16.mxu0 0
    %419 = vmatpush1.bf16.msra.mxu0 %v395
    %420 = vmatprep.subr.bf16.mxu0 0
    %421 = vmatpush1.bf16.msra.mxu0 0
    %422 = vmatprep.subr.bf16.mxu0 0
    %423 = vmatpush1.bf16.msra.mxu0 0
    %424 = vmatprep.subr.bf16.mxu0 0
    %425 = vmatpush1.bf16.msra.mxu0 0
    %426 = vmatprep.subr.bf16.mxu0 0
    %427 = vmatpush1.bf16.msra.mxu0 0
    %428 = vmatprep.subr.bf16.mxu0 0
    %429 = vmatpush1.bf16.msra.mxu0 0
    %430 = vmatprep.subr.bf16.mxu0 0
    %431 = vmatpush1.bf16.msra.mxu0 0
    %432 = vmatprep.subr.bf16.mxu0 0
    %433 = vmatpush1.bf16.msra.mxu0 0
    %434 = vmatprep.subr.bf16.mxu0 0
    %435 = vmatpush1.bf16.msra.mxu0 0
    %436 = vmatprep.mubr.bf16.mxu0 0
    %437 = vmatmul.mubr.bf16.gmra.mrb[0].mxu0 %v354
    %v438 = vpop.f32.mrb[0].mxu0
    %v439 = vadd.f32 0.0, %v438
    %v440 = vpop.f32.mrb[0].mxu0
    %v441 = vpop.f32.mrb[0].mxu0
    %v442 = vadd.f32 0.0, %v441
    %v443 = vpop.f32.mrb[0].mxu0
    %444 = vdwg.mxu0
    %v445 = vadd.f32 %v332, %v439
    %v446 = vadd.f32 %v333, %v442
    %v447 = vtanh.pop %v445
    %v448 = vtanh.pop %v446
    %v450 = vlaneseq
    %v451 = vshrl.u32 %v450, 7
    %v452 = vsub.s32 0, %v451
    %v453 = vrot.slane %v216, %v452
    %v455 = vmul.f32 %v447, %v453
    %v456 = vmul.f32 %v448, %v453
    %457 = vadd.xlane.f32.xlu0 %v455
    %v458 = vpop.xlane.xlu0 %457
    %459 = vadd.xlane.f32.xlu0 %v456
    %v460 = vpop.xlane.xlu0 %459
    %v461 = vld [vmem:[#allocation5 + $0x4] sm:$0xf]
    %v462 = vld [vmem:[#allocation5 + $0x10] sm:$0xf]
    %v463 = vmul.bf16 %v96, %v461
    %v464 = vmul.bf16 %v97, %v462
    %v467 = vunpack.c.l.b16 %v461
    %v468 = vunpack.c.l.b16 %v462
    %v469 = vpack.c.b16 %v468, %v467
    %471 = vmatprep.subr.bf16.mxu0 0
    %472 = vmatpush1.bf16.msra.mxu0 %v275
    %473 = vmatprep.subr.bf16.mxu0 0
    %474 = vmatpush1.bf16.msra.mxu0 %v276
    %475 = vmatprep.subr.bf16.mxu0 0
    %476 = vmatpush1.bf16.msra.mxu0 %v277
    %477 = vmatprep.subr.bf16.mxu0 0
    %478 = vmatpush1.bf16.msra.mxu0 %v278
    %479 = vmatprep.subr.bf16.mxu0 0
    %480 = vmatpush1.bf16.msra.mxu0 %v279
    %481 = vmatprep.subr.bf16.mxu0 0
    %482 = vmatpush1.bf16.msra.mxu0 %v280
    %483 = vmatprep.subr.bf16.mxu0 0
    %484 = vmatpush1.bf16.msra.mxu0 %v281
    %485 = vmatprep.subr.bf16.mxu0 0
    %486 = vmatpush1.bf16.msra.mxu0 %v282
    %487 = vmatprep.subr.bf16.mxu0 0
    %488 = vmatpush1.bf16.msra.mxu0 0
    %489 = vmatprep.subr.bf16.mxu0 0
    %490 = vmatpush1.bf16.msra.mxu0 0
    %491 = vmatprep.subr.bf16.mxu0 0
    %492 = vmatpush1.bf16.msra.mxu0 0
    %493 = vmatprep.subr.bf16.mxu0 0
    %494 = vmatpush1.bf16.msra.mxu0 0
    %495 = vmatprep.subr.bf16.mxu0 0
    %496 = vmatpush1.bf16.msra.mxu0 0
    %497 = vmatprep.subr.bf16.mxu0 0
    %498 = vmatpush1.bf16.msra.mxu0 0
    %499 = vmatprep.subr.bf16.mxu0 0
    %500 = vmatpush1.bf16.msra.mxu0 0
    %501 = vmatprep.subr.bf16.mxu0 0
    %502 = vmatpush1.bf16.msra.mxu0 0
    %503 = vmatprep.mubr.bf16.mxu0 0
    %504 = vmatmul.mubr.bf16.gmra.mrb[0].mxu0 %v469
    %v505 = vpop.f32.mrb[0].mxu0
    %v506 = vadd.f32 0.0, %v505
    %v507 = vpop.f32.mrb[0].mxu0
    %v508 = vpop.f32.mrb[0].mxu0
    %v509 = vadd.f32 0.0, %v508
    %v510 = vpop.f32.mrb[0].mxu0
    %511 = vdwg.mxu0
    %v512 = vadd.f32 %v210, %v506
    %v513 = vadd.f32 %v213, %v509
    %v516 = vunpack.c.l.b16 %v463
    %v517 = vunpack.c.l.b16 %v464
    %v518 = vpack.c.b16 %v517, %v516
    %520 = vmatprep.subr.bf16.mxu0 0
    %521 = vmatpush1.bf16.msra.mxu0 %v388
    %522 = vmatprep.subr.bf16.mxu0 0
    %523 = vmatpush1.bf16.msra.mxu0 %v389
    %524 = vmatprep.subr.bf16.mxu0 0
    %525 = vmatpush1.bf16.msra.mxu0 %v390
    %526 = vmatprep.subr.bf16.mxu0 0
    %527 = vmatpush1.bf16.msra.mxu0 %v391
    %528 = vmatprep.subr.bf16.mxu0 0
    %529 = vmatpush1.bf16.msra.mxu0 %v392
    %530 = vmatprep.subr.bf16.mxu0 0
    %531 = vmatpush1.bf16.msra.mxu0 %v393
    %532 = vmatprep.subr.bf16.mxu0 0
    %533 = vmatpush1.bf16.msra.mxu0 %v394
    %534 = vmatprep.subr.bf16.mxu0 0
    %535 = vmatpush1.bf16.msra.mxu0 %v395
    %536 = vmatprep.subr.bf16.mxu0 0
    %537 = vmatpush1.bf16.msra.mxu0 0
    %538 = vmatprep.subr.bf16.mxu0 0
    %539 = vmatpush1.bf16.msra.mxu0 0
    %540 = vmatprep.subr.bf16.mxu0 0
    %541 = vmatpush1.bf16.msra.mxu0 0
    %542 = vmatprep.subr.bf16.mxu0 0
    %543 = vmatpush1.bf16.msra.mxu0 0
    %544 = vmatprep.subr.bf16.mxu0 0
    %545 = vmatpush1.bf16.msra.mxu0 0
    %546 = vmatprep.subr.bf16.mxu0 0
    %547 = vmatpush1.bf16.msra.mxu0 0
    %548 = vmatprep.subr.bf16.mxu0 0
    %549 = vmatpush1.bf16.msra.mxu0 0
    %550 = vmatprep.subr.bf16.mxu0 0
    %551 = vmatpush1.bf16.msra.mxu0 0
    %552 = vmatprep.mubr.bf16.mxu0 0
    %553 = vmatmul.mubr.bf16.gmra.mrb[0].mxu0 %v518
    %v554 = vpop.f32.mrb[0].mxu0
    %v555 = vadd.f32 0.0, %v554
    %v556 = vpop.f32.mrb[0].mxu0
    %v557 = vpop.f32.mrb[0].mxu0
    %v558 = vadd.f32 0.0, %v557
    %v559 = vpop.f32.mrb[0].mxu0
    %560 = vdwg.mxu0
    %v561 = vadd.f32 %v512, %v555
    %v562 = vadd.f32 %v513, %v558
    %v563 = vtanh.pop %v561
    %v564 = vtanh.pop %v562
    %v565 = vmul.f32 %v563, %v453
    %v566 = vmul.f32 %v564, %v453
    %567 = vadd.xlane.f32.xlu0 %v565
    %v568 = vpop.xlane.xlu0 %567
    %569 = vadd.xlane.f32.xlu0 %v566
    %v570 = vpop.xlane.xlu0 %569
    %v571 = vmax.f32 %v458, %v568
    %v572 = vmax.f32 %v460, %v570
    %v573 = vld [vmem:[#allocation5 + $0x8] sm:$0xf]
    %v574 = vld [vmem:[#allocation5 + $0x14] sm:$0xf]
    %v575 = vmul.bf16 %v96, %v573
    %v576 = vmul.bf16 %v97, %v574
    %v579 = vunpack.c.l.b16 %v573
    %v580 = vunpack.c.l.b16 %v574
    %v581 = vpack.c.b16 %v580, %v579
    %583 = vmatprep.subr.bf16.mxu0 0
    %584 = vmatpush1.bf16.msra.mxu0 %v275
    %585 = vmatprep.subr.bf16.mxu0 0
    %586 = vmatpush1.bf16.msra.mxu0 %v276
    %587 = vmatprep.subr.bf16.mxu0 0
    %588 = vmatpush1.bf16.msra.mxu0 %v277
    %589 = vmatprep.subr.bf16.mxu0 0
    %590 = vmatpush1.bf16.msra.mxu0 %v278
    %591 = vmatprep.subr.bf16.mxu0 0
    %592 = vmatpush1.bf16.msra.mxu0 %v279
    %593 = vmatprep.subr.bf16.mxu0 0
    %594 = vmatpush1.bf16.msra.mxu0 %v280
    %595 = vmatprep.subr.bf16.mxu0 0
    %596 = vmatpush1.bf16.msra.mxu0 %v281
    %597 = vmatprep.subr.bf16.mxu0 0
    %598 = vmatpush1.bf16.msra.mxu0 %v282
    %599 = vmatprep.subr.bf16.mxu0 0
    %600 = vmatpush1.bf16.msra.mxu0 0
    %601 = vmatprep.subr.bf16.mxu0 0
    %602 = vmatpush1.bf16.msra.mxu0 0
    %603 = vmatprep.subr.bf16.mxu0 0
    %604 = vmatpush1.bf16.msra.mxu0 0
    %605 = vmatprep.subr.bf16.mxu0 0
    %606 = vmatpush1.bf16.msra.mxu0 0
    %607 = vmatprep.subr.bf16.mxu0 0
    %608 = vmatpush1.bf16.msra.mxu0 0
    %609 = vmatprep.subr.bf16.mxu0 0
    %610 = vmatpush1.bf16.msra.mxu0 0
    %611 = vmatprep.subr.bf16.mxu0 0
    %612 = vmatpush1.bf16.msra.mxu0 0
    %613 = vmatprep.subr.bf16.mxu0 0
    %614 = vmatpush1.bf16.msra.mxu0 0
    %615 = vmatprep.mubr.bf16.mxu0 0
    %616 = vmatmul.mubr.bf16.gmra.mrb[0].mxu0 %v581
    %v617 = vpop.f32.mrb[0].mxu0
    %v618 = vadd.f32 0.0, %v617
    %v619 = vpop.f32.mrb[0].mxu0
    %v620 = vpop.f32.mrb[0].mxu0
    %v621 = vadd.f32 0.0, %v620
    %v622 = vpop.f32.mrb[0].mxu0
    %623 = vdwg.mxu0
    %v624 = vadd.f32 %v210, %v618
    %v625 = vadd.f32 %v213, %v621
    %v628 = vunpack.c.l.b16 %v575
    %v629 = vunpack.c.l.b16 %v576
    %v630 = vpack.c.b16 %v629, %v628
    %632 = vmatprep.subr.bf16.mxu0 0
    %633 = vmatpush1.bf16.msra.mxu0 %v388
    %634 = vmatprep.subr.bf16.mxu0 0
    %635 = vmatpush1.bf16.msra.mxu0 %v389
    %636 = vmatprep.subr.bf16.mxu0 0
    %637 = vmatpush1.bf16.msra.mxu0 %v390
    %638 = vmatprep.subr.bf16.mxu0 0
    %639 = vmatpush1.bf16.msra.mxu0 %v391
    %640 = vmatprep.subr.bf16.mxu0 0
    %641 = vmatpush1.bf16.msra.mxu0 %v392
    %642 = vmatprep.subr.bf16.mxu0 0
    %643 = vmatpush1.bf16.msra.mxu0 %v393
    %644 = vmatprep.subr.bf16.mxu0 0
    %645 = vmatpush1.bf16.msra.mxu0 %v394
    %646 = vmatprep.subr.bf16.mxu0 0
    %647 = vmatpush1.bf16.msra.mxu0 %v395
    %648 = vmatprep.subr.bf16.mxu0 0
    %649 = vmatpush1.bf16.msra.mxu0 0
    %650 = vmatprep.subr.bf16.mxu0 0
    %651 = vmatpush1.bf16.msra.mxu0 0
    %652 = vmatprep.subr.bf16.mxu0 0
    %653 = vmatpush1.bf16.msra.mxu0 0
    %654 = vmatprep.subr.bf16.mxu0 0
    %655 = vmatpush1.bf16.msra.mxu0 0
    %656 = vmatprep.subr.bf16.mxu0 0
    %657 = vmatpush1.bf16.msra.mxu0 0
    %658 = vmatprep.subr.bf16.mxu0 0
    %659 = vmatpush1.bf16.msra.mxu0 0
    %660 = vmatprep.subr.bf16.mxu0 0
    %661 = vmatpush1.bf16.msra.mxu0 0
    %662 = vmatprep.subr.bf16.mxu0 0
    %663 = vmatpush1.bf16.msra.mxu0 0
    %664 = vmatprep.mubr.bf16.mxu0 0
    %665 = vmatmul.mubr.bf16.gmra.mrb[0].mxu0 %v630
    %v666 = vpop.f32.mrb[0].mxu0
    %v667 = vadd.f32 0.0, %v666
    %v668 = vpop.f32.mrb[0].mxu0
    %v669 = vpop.f32.mrb[0].mxu0
    %v670 = vadd.f32 0.0, %v669
    %v671 = vpop.f32.mrb[0].mxu0
    %672 = vdwg.mxu0
    %v673 = vadd.f32 %v624, %v667
    %v674 = vadd.f32 %v625, %v670
    %v675 = vtanh.pop %v673
    %v676 = vtanh.pop %v674
    %v677 = vmul.f32 %v675, %v453
    %v678 = vmul.f32 %v676, %v453
    %679 = vadd.xlane.f32.xlu0 %v677
    %v680 = vpop.xlane.xlu0 %679
    %681 = vadd.xlane.f32.xlu0 %v678
    %v682 = vpop.xlane.xlu0 %681
    %v683 = vmax.f32 %v571, %v680
    %v684 = vmax.f32 %v572, %v682
    %685 = vst [vmem:[#allocation11] sm:$0xff] %v683
    %686 = vst [vmem:[#allocation11 + $0x8] sm:$0xff] %v684
    // Predicated region
    $region50: #{tpu_custom_call.1} parent=1 // pred_check
      _
    $region51: #{tpu_custom_call.1} parent=1 // pred_check_branch
      %688 = sbr.rel (0) target = $region53
    $region52: #{tpu_custom_call.1} parent=1 // pred_region
      %s690 = ssub.s32 256, 256
      %691 = vsyncadd [#allocation4], %s690
      %s692 = sshll.u32 [#allocation11], 4
      %s693 = int_to_ptr.vmem [resolvable:$true] %s692
      %698 = dma.vmem_to_hbm [thread:$0]  %s693, 256, %s7, [#allocation4], 128, 128, 8
    $region53: #{tpu_custom_call.1} parent=1 // pred_fallthru
      _
    // Predicated region
    $region54: #{tpu_custom_call.1} parent=1 // pred_check
      _
    $region55: #{tpu_custom_call.1} parent=1 // pred_check_branch
      %700 = sbr.rel (0) target = $region57
    $region56: #{tpu_custom_call.1} parent=1 // pred_region
      %701 = dma.done [#allocation4], 256
    $region57: #{tpu_custom_call.1} parent=1 // pred_fallthru
      _
    %702 = vsyncpa [#allocation3], 1
    %703 = vsyncpa [#allocation6], 1
    %704 = vsyncpa [#allocation9], 1
    %705 = vsyncpa [#allocation4], 1

</llo_original>
